<compile_context>
chip_gen: v5e
topology: v5e:2x2
jax: 0.10.0
libtpu: 0.0.40
codegen_flags: <defaults>
</compile_context>

<pallas_src>
import functools

import jax
import jax.numpy as jnp
from jax.experimental import pallas as pl
from jax.experimental.pallas import tpu as pltpu


# ----------------------------------------------------------------------------
# Fused kernel: L x LSTM layers + Linear head, single invocation.
# ----------------------------------------------------------------------------
def _rnn_fused_kernel(n_layers, T, B, H, *refs):
    """Fused multi-layer LSTM + Linear forward.

    refs layout:
      inputs : x (T*B, IN0) bf16                 [time-major flat, row = t*B+b]
               h0 (L, B, H) f32, c0 (L, B, H) f32
               per layer l: w_ih_l (IN_l, 4H) bf16, w_hh_l (H, 4H) bf16,
                            b_l (1, 4H) f32 (= b_ih + b_hh)
               fc_w (H, V) bf16, fc_b (1, V) f32
      outputs: logits_tm (T*B, V) f32 [time-major rows],
               h_n (L, B, H) f32, c_n (L, B, H) f32
      scratch: act_sc (T*B, H) f32  -- current layer's hidden outputs over time
    """
    x_ref, h0_ref, c0_ref = refs[0:3]
    layer_refs = refs[3:3 + 3 * n_layers]
    fc_w_ref, fc_b_ref = refs[3 + 3 * n_layers:5 + 3 * n_layers]
    logits_ref, hN_ref, cN_ref = refs[5 + 3 * n_layers:8 + 3 * n_layers]
    (act_sc,) = refs[8 + 3 * n_layers:]

    layer_in = x_ref[...]                                   # (T*B, IN0) bf16

    for l in range(n_layers):
        w_ih = layer_refs[3 * l + 0][...]                   # (IN_l, 4H) bf16
        w_hh = layer_refs[3 * l + 1][...]                   # (H, 4H)    bf16
        bias = layer_refs[3 * l + 2][...]                   # (1, 4H)    f32

        # Hoisted input projection: one MXU matmul covering all T timesteps.
        gin = jnp.dot(layer_in, w_ih,
                      preferred_element_type=jnp.float32) + bias   # (T*B, 4H)

        h = h0_ref[l].astype(jnp.float32)                   # (B, H)
        c = c0_ref[l].astype(jnp.float32)                   # (B, H)

        # Fully unrolled time recurrence (T is static).  Only the recurrent
        # matmul is on the serial critical path.
        for t in range(T):
            gates = gin[t * B:(t + 1) * B, :] + jnp.dot(
                h.astype(jnp.bfloat16), w_hh,
                preferred_element_type=jnp.float32)          # (B, 4H) [i,f,g,o]
            i_g = jax.nn.sigmoid(gates[:, 0 * H:1 * H])
            f_g = jax.nn.sigmoid(gates[:, 1 * H:2 * H])
            g_g = jnp.tanh(gates[:, 2 * H:3 * H])
            o_g = jax.nn.sigmoid(gates[:, 3 * H:4 * H])
            c = f_g * c + i_g * g_g
            h = o_g * jnp.tanh(c)
            act_sc[t * B:(t + 1) * B, :] = h                 # static-offset store

        hN_ref[l] = h
        cN_ref[l] = c

        if l + 1 < n_layers:
            # TODO(synk): inter-layer LSTM dropout (p=0.5) is identity in eval
            # mode; intentionally not applied.
            layer_in = act_sc[...].astype(jnp.bfloat16)      # (T*B, H) bf16

    # Final Linear on all T*B rows at once.  fc is row-wise, so computing it in
    # time-major order and permuting rows afterwards (in the wrapper) is exact.
    act = act_sc[...].astype(jnp.bfloat16)                   # (T*B, H)
    logits_ref[...] = (jnp.dot(act, fc_w_ref[...],
                               preferred_element_type=jnp.float32)
                       + fc_b_ref[...])


# ----------------------------------------------------------------------------
# Wrapper: full RNN.forward equivalent (eval mode).
# ----------------------------------------------------------------------------
def rnn_forward(params, x_btv, hidden):
    """x_btv: (B, T, IN) batch_first; hidden: (h0, c0) each (n_layers, B, H).
    Returns (out (B*T, V), (h_n, c_n))."""
    h0_all, c0_all = hidden
    n_layers = len(params["lstm"])
    B, T, _ = x_btv.shape
    H = h0_all.shape[-1]
    V = params["fc_w"].shape[0]

    # Time-major flat input (row = t*B + b); bf16 is the MXU operand dtype.
    x_tm = (jnp.transpose(x_btv, (1, 0, 2))
            .reshape(T * B, -1).astype(jnp.bfloat16))

    args = [x_tm, h0_all.astype(jnp.float32), c0_all.astype(jnp.float32)]
    for p in params["lstm"]:
        args.append(jnp.transpose(p["w_ih"]).astype(jnp.bfloat16))     # (IN, 4H)
        args.append(jnp.transpose(p["w_hh"]).astype(jnp.bfloat16))     # (H, 4H)
        args.append((p["b_ih"] + p["b_hh"]).reshape(1, 4 * H)
                    .astype(jnp.float32))                              # (1, 4H)
    args.append(jnp.transpose(params["fc_w"]).astype(jnp.bfloat16))    # (H, V)
    args.append(params["fc_b"].reshape(1, V).astype(jnp.float32))      # (1, V)

    kernel = functools.partial(_rnn_fused_kernel, n_layers, T, B, H)
    logits_tm, h_n, c_n = pl.pallas_call(
        kernel,
        out_shape=(
            jax.ShapeDtypeStruct((T * B, V), jnp.float32),
            jax.ShapeDtypeStruct((n_layers, B, H), jnp.float32),
            jax.ShapeDtypeStruct((n_layers, B, H), jnp.float32),
        ),
        scratch_shapes=[pltpu.VMEM((T * B, H), jnp.float32)],
    )(*args)

    # Row permutation (t, b) -> (b, t): matches out.contiguous().view(-1, H)
    # on the batch_first (B, T, H) LSTM output.  Tiny XLA layout plumbing.
    out = logits_tm.reshape(T, B, V).transpose(1, 0, 2).reshape(B * T, V)
    return out, (h_n, c_n)


# ----------------------------------------------------------------------------
# Pure-JAX reference: mirrors the PyTorch module math with the same matmul
# operand precision as the kernel (bf16 MXU inputs, f32 accumulation,
# f32 state / gate nonlinearities).
# ----------------------------------------------------------------------------
def rnn_forward_ref(params, x_btv, hidden):
    h0_all, c0_all = hidden
    B, T, _ = x_btv.shape
    layer_in = jnp.transpose(x_btv, (1, 0, 2))             # (T, B, IN)
    hs, cs = [], []
    for l, p in enumerate(params["lstm"]):
        w_ih_t = jnp.transpose(p["w_ih"]).astype(jnp.bfloat16)
        w_hh_t = jnp.transpose(p["w_hh"]).astype(jnp.bfloat16)
        bias = (p["b_ih"] + p["b_hh"]).astype(jnp.float32)
        H = p["w_hh"].shape[1]

        def step(carry, x_t, w_ih_t=w_ih_t, w_hh_t=w_hh_t, bias=bias, H=H):
            h, c = carry
            gates = (jnp.dot(x_t.astype(jnp.bfloat16), w_ih_t,
                             preferred_element_type=jnp.float32)
                     + jnp.dot(h.astype(jnp.bfloat16), w_hh_t,
                               preferred_element_type=jnp.float32)
                     + bias)
            i = jax.nn.sigmoid(gates[:, 0 * H:1 * H])
            f = jax.nn.sigmoid(gates[:, 1 * H:2 * H])
            g = jnp.tanh(gates[:, 2 * H:3 * H])
            o = jax.nn.sigmoid(gates[:, 3 * H:4 * H])
            c_new = f * c + i * g
            h_new = o * jnp.tanh(c_new)
            return (h_new, c_new), h_new

        (hT, cT), y = jax.lax.scan(step, (h0_all[l], c0_all[l]), layer_in)
        hs.append(hT)
        cs.append(cT)
        layer_in = y

    out = jnp.transpose(layer_in, (1, 0, 2)).reshape(B * T, -1)
    logits = (jnp.dot(out.astype(jnp.bfloat16),
                      jnp.transpose(params["fc_w"]).astype(jnp.bfloat16),
                      preferred_element_type=jnp.float32)
              + params["fc_b"].astype(jnp.float32))
    return logits, (jnp.stack(hs), jnp.stack(cs))


# ----------------------------------------------------------------------------
# Deterministic parameter init (PyTorch-like uniform(-1/sqrt(H), 1/sqrt(H))).
# ----------------------------------------------------------------------------
def init_params(key, vocab, hidden, n_layers):
    bound = 1.0 / jnp.sqrt(jnp.float32(hidden))
    params = {"lstm": []}
    for l in range(n_layers):
        in_size = vocab if l == 0 else hidden
        key, k1, k2, k3, k4 = jax.random.split(key, 5)
        params["lstm"].append({
            "w_ih": jax.random.uniform(k1, (4 * hidden, in_size),
                                       jnp.float32, -bound, bound),
            "w_hh": jax.random.uniform(k2, (4 * hidden, hidden),
                                       jnp.float32, -bound, bound),
            "b_ih": jax.random.uniform(k3, (4 * hidden,),
                                       jnp.float32, -bound, bound),
            "b_hh": jax.random.uniform(k4, (4 * hidden,),
                                       jnp.float32, -bound, bound),
        })
    key, k1, k2 = jax.random.split(key, 3)
    params["fc_w"] = jax.random.uniform(k1, (vocab, hidden),
                                        jnp.float32, -bound, bound)
    params["fc_b"] = jax.random.uniform(k2, (vocab,),
                                        jnp.float32, -bound, bound)
    return params


if __name__ == "__main__":
    VOCAB = 16       # len(alphabet)
    HIDDEN = 32
    N_LAYERS = 2
    B, T = 2, 8

    key = jax.random.PRNGKey(0)
    key, pkey, xkey, hkey, ckey = jax.random.split(key, 5)
    params = init_params(pkey, VOCAB, HIDDEN, N_LAYERS)

    # One-hot-ish input (B, T, VOCAB), batch_first like PyTorch; arbitrary
    # (non-zero) hidden state to exercise the h0/c0 path.
    x = jax.random.normal(xkey, (B, T, VOCAB), jnp.float32)
    hidden = (0.1 * jax.random.normal(hkey, (N_LAYERS, B, HIDDEN), jnp.float32),
              0.1 * jax.random.normal(ckey, (N_LAYERS, B, HIDDEN), jnp.float32))

    fwd = jax.jit(functools.partial(rnn_forward, params))
    out, (h_n, c_n) = fwd(x, hidden)
    jax.block_until_ready((out, h_n, c_n))

    out_ref, (h_ref, c_ref) = rnn_forward_ref(params, x, hidden)
    assert out.shape == (B * T, VOCAB)
    assert h_n.shape == (N_LAYERS, B, HIDDEN) and c_n.shape == (N_LAYERS, B, HIDDEN)
    assert jnp.allclose(out, out_ref, atol=1e-3, rtol=1e-3), (
        "logits mismatch, max |diff| = %g"
        % float(jnp.max(jnp.abs(out - out_ref))))
    assert jnp.allclose(h_n, h_ref, atol=1e-3, rtol=1e-3), "h_n mismatch"
    assert jnp.allclose(c_n, c_ref, atol=1e-3, rtol=1e-3), "c_n mismatch"

    print("KERNEL_OK")
</pallas_src>

<mosaic_0001>
module attributes {stable_mosaic.version = 11 : i64} {
  func.func @_rnn_fused_kernel(%arg0: memref<16x16xbf16, #tpu.memory_space<vmem>>, %arg1: memref<2x2x32xf32, #tpu.memory_space<vmem>>, %arg2: memref<2x2x32xf32, #tpu.memory_space<vmem>>, %arg3: memref<16x128xbf16, #tpu.memory_space<vmem>>, %arg4: memref<32x128xbf16, #tpu.memory_space<vmem>>, %arg5: memref<1x128xf32, #tpu.memory_space<vmem>>, %arg6: memref<32x128xbf16, #tpu.memory_space<vmem>>, %arg7: memref<32x128xbf16, #tpu.memory_space<vmem>>, %arg8: memref<1x128xf32, #tpu.memory_space<vmem>>, %arg9: memref<32x16xbf16, #tpu.memory_space<vmem>>, %arg10: memref<1x16xf32, #tpu.memory_space<vmem>>, %arg11: memref<16x16xf32, #tpu.memory_space<vmem>>, %arg12: memref<2x2x32xf32, #tpu.memory_space<vmem>>, %arg13: memref<2x2x32xf32, #tpu.memory_space<vmem>>, %arg14: memref<16x32xf32, #tpu.memory_space<vmem>>) attributes {dimension_semantics = [], scalar_prefetch = 0 : i64, scratch_operands = 1 : i64, tpu.core_type = #tpu.core_type<tc>} {
    %c0 = arith.constant 0 : index
    %c0_0 = arith.constant 0 : index
    %0 = vector.load %arg0[%c0, %c0_0] : memref<16x16xbf16, #tpu.memory_space<vmem>>, vector<16x16xbf16>
    %c0_1 = arith.constant 0 : index
    %c0_2 = arith.constant 0 : index
    %1 = vector.load %arg3[%c0_1, %c0_2] : memref<16x128xbf16, #tpu.memory_space<vmem>>, vector<16x128xbf16>
    %c0_3 = arith.constant 0 : index
    %c0_4 = arith.constant 0 : index
    %2 = vector.load %arg4[%c0_3, %c0_4] : memref<32x128xbf16, #tpu.memory_space<vmem>>, vector<32x128xbf16>
    %c0_5 = arith.constant 0 : index
    %c0_6 = arith.constant 0 : index
    %3 = vector.load %arg5[%c0_5, %c0_6] : memref<1x128xf32, #tpu.memory_space<vmem>>, vector<1x128xf32>
    %cst = arith.constant dense<0.000000e+00> : vector<16x128xf32>
    %4 = tpu.matmul %0, %1, %cst {dimension_numbers = #tpu.dot_dimension_numbers<[1], [0], [0], [1], [0, 0, 1, 1], [], []>} : vector<16x16xbf16>, vector<16x128xbf16>, vector<16x128xf32> -> vector<16x128xf32>
    %5 = vector.broadcast %3 : vector<1x128xf32> to vector<16x128xf32>
    %6 = arith.addf %4, %5 : vector<16x128xf32>
    %c0_7 = arith.constant 0 : index
    %c0_8 = arith.constant 0 : index
    %c0_9 = arith.constant 0 : index
    %7 = vector.load %arg1[%c0_7, %c0_8, %c0_9] : memref<2x2x32xf32, #tpu.memory_space<vmem>>, vector<1x2x32xf32>
    %8 = vector.shape_cast %7 : vector<1x2x32xf32> to vector<2x32xf32>
    %c0_10 = arith.constant 0 : index
    %c0_11 = arith.constant 0 : index
    %c0_12 = arith.constant 0 : index
    %9 = vector.load %arg2[%c0_10, %c0_11, %c0_12] : memref<2x2x32xf32, #tpu.memory_space<vmem>>, vector<1x2x32xf32>
    %10 = vector.shape_cast %9 : vector<1x2x32xf32> to vector<2x32xf32>
    %11 = vector.extract_strided_slice %6 {offsets = [0, 0], sizes = [2, 128], strides = [1, 1]} : vector<16x128xf32> to vector<2x128xf32>
    %12 = arith.truncf %8 : vector<2x32xf32> to vector<2x32xbf16>
    %cst_13 = arith.constant dense<0.000000e+00> : vector<2x128xf32>
    %13 = tpu.matmul %12, %2, %cst_13 {dimension_numbers = #tpu.dot_dimension_numbers<[1], [0], [0], [1], [0, 0, 1, 1], [], []>} : vector<2x32xbf16>, vector<32x128xbf16>, vector<2x128xf32> -> vector<2x128xf32>
    %14 = arith.addf %11, %13 : vector<2x128xf32>
    %15 = vector.extract_strided_slice %14 {offsets = [0, 0], sizes = [2, 32], strides = [1, 1]} : vector<2x128xf32> to vector<2x32xf32>
    %16 = arith.negf %15 : vector<2x32xf32>
    %17 = math.exp %16 : vector<2x32xf32>
    %cst_14 = arith.constant 1.000000e+00 : f32
    %18 = vector.broadcast %cst_14 : f32 to vector<2x32xf32>
    %19 = arith.addf %18, %17 : vector<2x32xf32>
    %20 = arith.divf %18, %19 : vector<2x32xf32>
    %21 = vector.extract_strided_slice %14 {offsets = [0, 32], sizes = [2, 32], strides = [1, 1]} : vector<2x128xf32> to vector<2x32xf32>
    %22 = arith.negf %21 : vector<2x32xf32>
    %23 = math.exp %22 : vector<2x32xf32>
    %cst_15 = arith.constant 1.000000e+00 : f32
    %24 = vector.broadcast %cst_15 : f32 to vector<2x32xf32>
    %25 = arith.addf %24, %23 : vector<2x32xf32>
    %26 = arith.divf %24, %25 : vector<2x32xf32>
    %27 = vector.extract_strided_slice %14 {offsets = [0, 64], sizes = [2, 32], strides = [1, 1]} : vector<2x128xf32> to vector<2x32xf32>
    %28 = math.tanh %27 : vector<2x32xf32>
    %29 = vector.extract_strided_slice %14 {offsets = [0, 96], sizes = [2, 32], strides = [1, 1]} : vector<2x128xf32> to vector<2x32xf32>
    %30 = arith.negf %29 : vector<2x32xf32>
    %31 = math.exp %30 : vector<2x32xf32>
    %cst_16 = arith.constant 1.000000e+00 : f32
    %32 = vector.broadcast %cst_16 : f32 to vector<2x32xf32>
    %33 = arith.addf %32, %31 : vector<2x32xf32>
    %34 = arith.divf %32, %33 : vector<2x32xf32>
    %35 = arith.mulf %26, %10 : vector<2x32xf32>
    %36 = arith.mulf %20, %28 : vector<2x32xf32>
    %37 = arith.addf %35, %36 : vector<2x32xf32>
    %38 = math.tanh %37 : vector<2x32xf32>
    %39 = arith.mulf %34, %38 : vector<2x32xf32>
    %c0_17 = arith.constant 0 : index
    %c0_18 = arith.constant 0 : index
    %40 = vector.load %arg14[%c0_17, %c0_18] : memref<16x32xf32, #tpu.memory_space<vmem>>, vector<2x32xf32>
    tpu.vector_store %arg14[%c0_17, %c0_18], %39 {strides = array<i32>} : memref<16x32xf32, #tpu.memory_space<vmem>>, vector<2x32xf32>,
    %41 = vector.extract_strided_slice %6 {offsets = [2, 0], sizes = [2, 128], strides = [1, 1]} : vector<16x128xf32> to vector<2x128xf32>
    %42 = arith.truncf %39 : vector<2x32xf32> to vector<2x32xbf16>
    %cst_19 = arith.constant dense<0.000000e+00> : vector<2x128xf32>
    %43 = tpu.matmul %42, %2, %cst_19 {dimension_numbers = #tpu.dot_dimension_numbers<[1], [0], [0], [1], [0, 0, 1, 1], [], []>} : vector<2x32xbf16>, vector<32x128xbf16>, vector<2x128xf32> -> vector<2x128xf32>
    %44 = arith.addf %41, %43 : vector<2x128xf32>
    %45 = vector.extract_strided_slice %44 {offsets = [0, 0], sizes = [2, 32], strides = [1, 1]} : vector<2x128xf32> to vector<2x32xf32>
    %46 = arith.negf %45 : vector<2x32xf32>
    %47 = math.exp %46 : vector<2x32xf32>
    %cst_20 = arith.constant 1.000000e+00 : f32
    %48 = vector.broadcast %cst_20 : f32 to vector<2x32xf32>
    %49 = arith.addf %48, %47 : vector<2x32xf32>
    %50 = arith.divf %48, %49 : vector<2x32xf32>
    %51 = vector.extract_strided_slice %44 {offsets = [0, 32], sizes = [2, 32], strides = [1, 1]} : vector<2x128xf32> to vector<2x32xf32>
    %52 = arith.negf %51 : vector<2x32xf32>
    %53 = math.exp %52 : vector<2x32xf32>
    %cst_21 = arith.constant 1.000000e+00 : f32
    %54 = vector.broadcast %cst_21 : f32 to vector<2x32xf32>
    %55 = arith.addf %54, %53 : vector<2x32xf32>
    %56 = arith.divf %54, %55 : vector<2x32xf32>
    %57 = vector.extract_strided_slice %44 {offsets = [0, 64], sizes = [2, 32], strides = [1, 1]} : vector<2x128xf32> to vector<2x32xf32>
    %58 = math.tanh %57 : vector<2x32xf32>
    %59 = vector.extract_strided_slice %44 {offsets = [0, 96], sizes = [2, 32], strides = [1, 1]} : vector<2x128xf32> to vector<2x32xf32>
    %60 = arith.negf %59 : vector<2x32xf32>
    %61 = math.exp %60 : vector<2x32xf32>
    %cst_22 = arith.constant 1.000000e+00 : f32
    %62 = vector.broadcast %cst_22 : f32 to vector<2x32xf32>
    %63 = arith.addf %62, %61 : vector<2x32xf32>
    %64 = arith.divf %62, %63 : vector<2x32xf32>
    %65 = arith.mulf %56, %37 : vector<2x32xf32>
    %66 = arith.mulf %50, %58 : vector<2x32xf32>
    %67 = arith.addf %65, %66 : vector<2x32xf32>
    %68 = math.tanh %67 : vector<2x32xf32>
    %69 = arith.mulf %64, %68 : vector<2x32xf32>
    %c2 = arith.constant 2 : index
    %c0_23 = arith.constant 0 : index
    %70 = vector.load %arg14[%c2, %c0_23] : memref<16x32xf32, #tpu.memory_space<vmem>>, vector<2x32xf32>
    tpu.vector_store %arg14[%c2, %c0_23], %69 {strides = array<i32>} : memref<16x32xf32, #tpu.memory_space<vmem>>, vector<2x32xf32>,
    %71 = vector.extract_strided_slice %6 {offsets = [4, 0], sizes = [2, 128], strides = [1, 1]} : vector<16x128xf32> to vector<2x128xf32>
    %72 = arith.truncf %69 : vector<2x32xf32> to vector<2x32xbf16>
    %cst_24 = arith.constant dense<0.000000e+00> : vector<2x128xf32>
    %73 = tpu.matmul %72, %2, %cst_24 {dimension_numbers = #tpu.dot_dimension_numbers<[1], [0], [0], [1], [0, 0, 1, 1], [], []>} : vector<2x32xbf16>, vector<32x128xbf16>, vector<2x128xf32> -> vector<2x128xf32>
    %74 = arith.addf %71, %73 : vector<2x128xf32>
    %75 = vector.extract_strided_slice %74 {offsets = [0, 0], sizes = [2, 32], strides = [1, 1]} : vector<2x128xf32> to vector<2x32xf32>
    %76 = arith.negf %75 : vector<2x32xf32>
    %77 = math.exp %76 : vector<2x32xf32>
    %cst_25 = arith.constant 1.000000e+00 : f32
    %78 = vector.broadcast %cst_25 : f32 to vector<2x32xf32>
    %79 = arith.addf %78, %77 : vector<2x32xf32>
    %80 = arith.divf %78, %79 : vector<2x32xf32>
    %81 = vector.extract_strided_slice %74 {offsets = [0, 32], sizes = [2, 32], strides = [1, 1]} : vector<2x128xf32> to vector<2x32xf32>
    %82 = arith.negf %81 : vector<2x32xf32>
    %83 = math.exp %82 : vector<2x32xf32>
    %cst_26 = arith.constant 1.000000e+00 : f32
    %84 = vector.broadcast %cst_26 : f32 to vector<2x32xf32>
    %85 = arith.addf %84, %83 : vector<2x32xf32>
    %86 = arith.divf %84, %85 : vector<2x32xf32>
    %87 = vector.extract_strided_slice %74 {offsets = [0, 64], sizes = [2, 32], strides = [1, 1]} : vector<2x128xf32> to vector<2x32xf32>
    %88 = math.tanh %87 : vector<2x32xf32>
    %89 = vector.extract_strided_slice %74 {offsets = [0, 96], sizes = [2, 32], strides = [1, 1]} : vector<2x128xf32> to vector<2x32xf32>
    %90 = arith.negf %89 : vector<2x32xf32>
    %91 = math.exp %90 : vector<2x32xf32>
    %cst_27 = arith.constant 1.000000e+00 : f32
    %92 = vector.broadcast %cst_27 : f32 to vector<2x32xf32>
    %93 = arith.addf %92, %91 : vector<2x32xf32>
    %94 = arith.divf %92, %93 : vector<2x32xf32>
    %95 = arith.mulf %86, %67 : vector<2x32xf32>
    %96 = arith.mulf %80, %88 : vector<2x32xf32>
    %97 = arith.addf %95, %96 : vector<2x32xf32>
    %98 = math.tanh %97 : vector<2x32xf32>
    %99 = arith.mulf %94, %98 : vector<2x32xf32>
    %c4 = arith.constant 4 : index
    %c0_28 = arith.constant 0 : index
    %100 = vector.load %arg14[%c4, %c0_28] : memref<16x32xf32, #tpu.memory_space<vmem>>, vector<2x32xf32>
    tpu.vector_store %arg14[%c4, %c0_28], %99 {strides = array<i32>} : memref<16x32xf32, #tpu.memory_space<vmem>>, vector<2x32xf32>,
    %101 = vector.extract_strided_slice %6 {offsets = [6, 0], sizes = [2, 128], strides = [1, 1]} : vector<16x128xf32> to vector<2x128xf32>
    %102 = arith.truncf %99 : vector<2x32xf32> to vector<2x32xbf16>
    %cst_29 = arith.constant dense<0.000000e+00> : vector<2x128xf32>
    %103 = tpu.matmul %102, %2, %cst_29 {dimension_numbers = #tpu.dot_dimension_numbers<[1], [0], [0], [1], [0, 0, 1, 1], [], []>} : vector<2x32xbf16>, vector<32x128xbf16>, vector<2x128xf32> -> vector<2x128xf32>
    %104 = arith.addf %101, %103 : vector<2x128xf32>
    %105 = vector.extract_strided_slice %104 {offsets = [0, 0], sizes = [2, 32], strides = [1, 1]} : vector<2x128xf32> to vector<2x32xf32>
    %106 = arith.negf %105 : vector<2x32xf32>
    %107 = math.exp %106 : vector<2x32xf32>
    %cst_30 = arith.constant 1.000000e+00 : f32
    %108 = vector.broadcast %cst_30 : f32 to vector<2x32xf32>
    %109 = arith.addf %108, %107 : vector<2x32xf32>
    %110 = arith.divf %108, %109 : vector<2x32xf32>
    %111 = vector.extract_strided_slice %104 {offsets = [0, 32], sizes = [2, 32], strides = [1, 1]} : vector<2x128xf32> to vector<2x32xf32>
    %112 = arith.negf %111 : vector<2x32xf32>
    %113 = math.exp %112 : vector<2x32xf32>
    %cst_31 = arith.constant 1.000000e+00 : f32
    %114 = vector.broadcast %cst_31 : f32 to vector<2x32xf32>
    %115 = arith.addf %114, %113 : vector<2x32xf32>
    %116 = arith.divf %114, %115 : vector<2x32xf32>
    %117 = vector.extract_strided_slice %104 {offsets = [0, 64], sizes = [2, 32], strides = [1, 1]} : vector<2x128xf32> to vector<2x32xf32>
    %118 = math.tanh %117 : vector<2x32xf32>
    %119 = vector.extract_strided_slice %104 {offsets = [0, 96], sizes = [2, 32], strides = [1, 1]} : vector<2x128xf32> to vector<2x32xf32>
    %120 = arith.negf %119 : vector<2x32xf32>
    %121 = math.exp %120 : vector<2x32xf32>
    %cst_32 = arith.constant 1.000000e+00 : f32
    %122 = vector.broadcast %cst_32 : f32 to vector<2x32xf32>
    %123 = arith.addf %122, %121 : vector<2x32xf32>
    %124 = arith.divf %122, %123 : vector<2x32xf32>
    %125 = arith.mulf %116, %97 : vector<2x32xf32>
    %126 = arith.mulf %110, %118 : vector<2x32xf32>
    %127 = arith.addf %125, %126 : vector<2x32xf32>
    %128 = math.tanh %127 : vector<2x32xf32>
    %129 = arith.mulf %124, %128 : vector<2x32xf32>
    %c6 = arith.constant 6 : index
    %c0_33 = arith.constant 0 : index
    %130 = vector.load %arg14[%c6, %c0_33] : memref<16x32xf32, #tpu.memory_space<vmem>>, vector<2x32xf32>
    tpu.vector_store %arg14[%c6, %c0_33], %129 {strides = array<i32>} : memref<16x32xf32, #tpu.memory_space<vmem>>, vector<2x32xf32>,
    %131 = vector.extract_strided_slice %6 {offsets = [8, 0], sizes = [2, 128], strides = [1, 1]} : vector<16x128xf32> to vector<2x128xf32>
    %132 = arith.truncf %129 : vector<2x32xf32> to vector<2x32xbf16>
    %cst_34 = arith.constant dense<0.000000e+00> : vector<2x128xf32>
    %133 = tpu.matmul %132, %2, %cst_34 {dimension_numbers = #tpu.dot_dimension_numbers<[1], [0], [0], [1], [0, 0, 1, 1], [], []>} : vector<2x32xbf16>, vector<32x128xbf16>, vector<2x128xf32> -> vector<2x128xf32>
    %134 = arith.addf %131, %133 : vector<2x128xf32>
    %135 = vector.extract_strided_slice %134 {offsets = [0, 0], sizes = [2, 32], strides = [1, 1]} : vector<2x128xf32> to vector<2x32xf32>
    %136 = arith.negf %135 : vector<2x32xf32>
    %137 = math.exp %136 : vector<2x32xf32>
    %cst_35 = arith.constant 1.000000e+00 : f32
    %138 = vector.broadcast %cst_35 : f32 to vector<2x32xf32>
    %139 = arith.addf %138, %137 : vector<2x32xf32>
    %140 = arith.divf %138, %139 : vector<2x32xf32>
    %141 = vector.extract_strided_slice %134 {offsets = [0, 32], sizes = [2, 32], strides = [1, 1]} : vector<2x128xf32> to vector<2x32xf32>
    %142 = arith.negf %141 : vector<2x32xf32>
    %143 = math.exp %142 : vector<2x32xf32>
    %cst_36 = arith.constant 1.000000e+00 : f32
    %144 = vector.broadcast %cst_36 : f32 to vector<2x32xf32>
    %145 = arith.addf %144, %143 : vector<2x32xf32>
    %146 = arith.divf %144, %145 : vector<2x32xf32>
    %147 = vector.extract_strided_slice %134 {offsets = [0, 64], sizes = [2, 32], strides = [1, 1]} : vector<2x128xf32> to vector<2x32xf32>
    %148 = math.tanh %147 : vector<2x32xf32>
    %149 = vector.extract_strided_slice %134 {offsets = [0, 96], sizes = [2, 32], strides = [1, 1]} : vector<2x128xf32> to vector<2x32xf32>
    %150 = arith.negf %149 : vector<2x32xf32>
    %151 = math.exp %150 : vector<2x32xf32>
    %cst_37 = arith.constant 1.000000e+00 : f32
    %152 = vector.broadcast %cst_37 : f32 to vector<2x32xf32>
    %153 = arith.addf %152, %151 : vector<2x32xf32>
    %154 = arith.divf %152, %153 : vector<2x32xf32>
    %155 = arith.mulf %146, %127 : vector<2x32xf32>
    %156 = arith.mulf %140, %148 : vector<2x32xf32>
    %157 = arith.addf %155, %156 : vector<2x32xf32>
    %158 = math.tanh %157 : vector<2x32xf32>
    %159 = arith.mulf %154, %158 : vector<2x32xf32>
    %c8 = arith.constant 8 : index
    %c0_38 = arith.constant 0 : index
    %160 = vector.load %arg14[%c8, %c0_38] : memref<16x32xf32, #tpu.memory_space<vmem>>, vector<2x32xf32>
    tpu.vector_store %arg14[%c8, %c0_38], %159 {strides = array<i32>} : memref<16x32xf32, #tpu.memory_space<vmem>>, vector<2x32xf32>,
    %161 = vector.extract_strided_slice %6 {offsets = [10, 0], sizes = [2, 128], strides = [1, 1]} : vector<16x128xf32> to vector<2x128xf32>
    %162 = arith.truncf %159 : vector<2x32xf32> to vector<2x32xbf16>
    %cst_39 = arith.constant dense<0.000000e+00> : vector<2x128xf32>
    %163 = tpu.matmul %162, %2, %cst_39 {dimension_numbers = #tpu.dot_dimension_numbers<[1], [0], [0], [1], [0, 0, 1, 1], [], []>} : vector<2x32xbf16>, vector<32x128xbf16>, vector<2x128xf32> -> vector<2x128xf32>
    %164 = arith.addf %161, %163 : vector<2x128xf32>
    %165 = vector.extract_strided_slice %164 {offsets = [0, 0], sizes = [2, 32], strides = [1, 1]} : vector<2x128xf32> to vector<2x32xf32>
    %166 = arith.negf %165 : vector<2x32xf32>
    %167 = math.exp %166 : vector<2x32xf32>
    %cst_40 = arith.constant 1.000000e+00 : f32
    %168 = vector.broadcast %cst_40 : f32 to vector<2x32xf32>
    %169 = arith.addf %168, %167 : vector<2x32xf32>
    %170 = arith.divf %168, %169 : vector<2x32xf32>
    %171 = vector.extract_strided_slice %164 {offsets = [0, 32], sizes = [2, 32], strides = [1, 1]} : vector<2x128xf32> to vector<2x32xf32>
    %172 = arith.negf %171 : vector<2x32xf32>
    %173 = math.exp %172 : vector<2x32xf32>
    %cst_41 = arith.constant 1.000000e+00 : f32
    %174 = vector.broadcast %cst_41 : f32 to vector<2x32xf32>
    %175 = arith.addf %174, %173 : vector<2x32xf32>
    %176 = arith.divf %174, %175 : vector<2x32xf32>
    %177 = vector.extract_strided_slice %164 {offsets = [0, 64], sizes = [2, 32], strides = [1, 1]} : vector<2x128xf32> to vector<2x32xf32>
    %178 = math.tanh %177 : vector<2x32xf32>
    %179 = vector.extract_strided_slice %164 {offsets = [0, 96], sizes = [2, 32], strides = [1, 1]} : vector<2x128xf32> to vector<2x32xf32>
    %180 = arith.negf %179 : vector<2x32xf32>
    %181 = math.exp %180 : vector<2x32xf32>
    %cst_42 = arith.constant 1.000000e+00 : f32
    %182 = vector.broadcast %cst_42 : f32 to vector<2x32xf32>
    %183 = arith.addf %182, %181 : vector<2x32xf32>
    %184 = arith.divf %182, %183 : vector<2x32xf32>
    %185 = arith.mulf %176, %157 : vector<2x32xf32>
    %186 = arith.mulf %170, %178 : vector<2x32xf32>
    %187 = arith.addf %185, %186 : vector<2x32xf32>
    %188 = math.tanh %187 : vector<2x32xf32>
    %189 = arith.mulf %184, %188 : vector<2x32xf32>
    %c10 = arith.constant 10 : index
    %c0_43 = arith.constant 0 : index
    %190 = vector.load %arg14[%c10, %c0_43] : memref<16x32xf32, #tpu.memory_space<vmem>>, vector<2x32xf32>
    tpu.vector_store %arg14[%c10, %c0_43], %189 {strides = array<i32>} : memref<16x32xf32, #tpu.memory_space<vmem>>, vector<2x32xf32>,
    %191 = vector.extract_strided_slice %6 {offsets = [12, 0], sizes = [2, 128], strides = [1, 1]} : vector<16x128xf32> to vector<2x128xf32>
    %192 = arith.truncf %189 : vector<2x32xf32> to vector<2x32xbf16>
    %cst_44 = arith.constant dense<0.000000e+00> : vector<2x128xf32>
    %193 = tpu.matmul %192, %2, %cst_44 {dimension_numbers = #tpu.dot_dimension_numbers<[1], [0], [0], [1], [0, 0, 1, 1], [], []>} : vector<2x32xbf16>, vector<32x128xbf16>, vector<2x128xf32> -> vector<2x128xf32>
    %194 = arith.addf %191, %193 : vector<2x128xf32>
    %195 = vector.extract_strided_slice %194 {offsets = [0, 0], sizes = [2, 32], strides = [1, 1]} : vector<2x128xf32> to vector<2x32xf32>
    %196 = arith.negf %195 : vector<2x32xf32>
    %197 = math.exp %196 : vector<2x32xf32>
    %cst_45 = arith.constant 1.000000e+00 : f32
    %198 = vector.broadcast %cst_45 : f32 to vector<2x32xf32>
    %199 = arith.addf %198, %197 : vector<2x32xf32>
    %200 = arith.divf %198, %199 : vector<2x32xf32>
    %201 = vector.extract_strided_slice %194 {offsets = [0, 32], sizes = [2, 32], strides = [1, 1]} : vector<2x128xf32> to vector<2x32xf32>
    %202 = arith.negf %201 : vector<2x32xf32>
    %203 = math.exp %202 : vector<2x32xf32>
    %cst_46 = arith.constant 1.000000e+00 : f32
    %204 = vector.broadcast %cst_46 : f32 to vector<2x32xf32>
    %205 = arith.addf %204, %203 : vector<2x32xf32>
    %206 = arith.divf %204, %205 : vector<2x32xf32>
    %207 = vector.extract_strided_slice %194 {offsets = [0, 64], sizes = [2, 32], strides = [1, 1]} : vector<2x128xf32> to vector<2x32xf32>
    %208 = math.tanh %207 : vector<2x32xf32>
    %209 = vector.extract_strided_slice %194 {offsets = [0, 96], sizes = [2, 32], strides = [1, 1]} : vector<2x128xf32> to vector<2x32xf32>
    %210 = arith.negf %209 : vector<2x32xf32>
    %211 = math.exp %210 : vector<2x32xf32>
    %cst_47 = arith.constant 1.000000e+00 : f32
    %212 = vector.broadcast %cst_47 : f32 to vector<2x32xf32>
    %213 = arith.addf %212, %211 : vector<2x32xf32>
    %214 = arith.divf %212, %213 : vector<2x32xf32>
    %215 = arith.mulf %206, %187 : vector<2x32xf32>
    %216 = arith.mulf %200, %208 : vector<2x32xf32>
    %217 = arith.addf %215, %216 : vector<2x32xf32>
    %218 = math.tanh %217 : vector<2x32xf32>
    %219 = arith.mulf %214, %218 : vector<2x32xf32>
    %c12 = arith.constant 12 : index
    %c0_48 = arith.constant 0 : index
    %220 = vector.load %arg14[%c12, %c0_48] : memref<16x32xf32, #tpu.memory_space<vmem>>, vector<2x32xf32>
    tpu.vector_store %arg14[%c12, %c0_48], %219 {strides = array<i32>} : memref<16x32xf32, #tpu.memory_space<vmem>>, vector<2x32xf32>,
    %221 = vector.extract_strided_slice %6 {offsets = [14, 0], sizes = [2, 128], strides = [1, 1]} : vector<16x128xf32> to vector<2x128xf32>
    %222 = arith.truncf %219 : vector<2x32xf32> to vector<2x32xbf16>
    %cst_49 = arith.constant dense<0.000000e+00> : vector<2x128xf32>
    %223 = tpu.matmul %222, %2, %cst_49 {dimension_numbers = #tpu.dot_dimension_numbers<[1], [0], [0], [1], [0, 0, 1, 1], [], []>} : vector<2x32xbf16>, vector<32x128xbf16>, vector<2x128xf32> -> vector<2x128xf32>
    %224 = arith.addf %221, %223 : vector<2x128xf32>
    %225 = vector.extract_strided_slice %224 {offsets = [0, 0], sizes = [2, 32], strides = [1, 1]} : vector<2x128xf32> to vector<2x32xf32>
    %226 = arith.negf %225 : vector<2x32xf32>
    %227 = math.exp %226 : vector<2x32xf32>
    %cst_50 = arith.constant 1.000000e+00 : f32
    %228 = vector.broadcast %cst_50 : f32 to vector<2x32xf32>
    %229 = arith.addf %228, %227 : vector<2x32xf32>
    %230 = arith.divf %228, %229 : vector<2x32xf32>
    %231 = vector.extract_strided_slice %224 {offsets = [0, 32], sizes = [2, 32], strides = [1, 1]} : vector<2x128xf32> to vector<2x32xf32>
    %232 = arith.negf %231 : vector<2x32xf32>
    %233 = math.exp %232 : vector<2x32xf32>
    %cst_51 = arith.constant 1.000000e+00 : f32
    %234 = vector.broadcast %cst_51 : f32 to vector<2x32xf32>
    %235 = arith.addf %234, %233 : vector<2x32xf32>
    %236 = arith.divf %234, %235 : vector<2x32xf32>
    %237 = vector.extract_strided_slice %224 {offsets = [0, 64], sizes = [2, 32], strides = [1, 1]} : vector<2x128xf32> to vector<2x32xf32>
    %238 = math.tanh %237 : vector<2x32xf32>
    %239 = vector.extract_strided_slice %224 {offsets = [0, 96], sizes = [2, 32], strides = [1, 1]} : vector<2x128xf32> to vector<2x32xf32>
    %240 = arith.negf %239 : vector<2x32xf32>
    %241 = math.exp %240 : vector<2x32xf32>
    %cst_52 = arith.constant 1.000000e+00 : f32
    %242 = vector.broadcast %cst_52 : f32 to vector<2x32xf32>
    %243 = arith.addf %242, %241 : vector<2x32xf32>
    %244 = arith.divf %242, %243 : vector<2x32xf32>
    %245 = arith.mulf %236, %217 : vector<2x32xf32>
    %246 = arith.mulf %230, %238 : vector<2x32xf32>
    %247 = arith.addf %245, %246 : vector<2x32xf32>
    %248 = math.tanh %247 : vector<2x32xf32>
    %249 = arith.mulf %244, %248 : vector<2x32xf32>
    %c14 = arith.constant 14 : index
    %c0_53 = arith.constant 0 : index
    %250 = vector.load %arg14[%c14, %c0_53] : memref<16x32xf32, #tpu.memory_space<vmem>>, vector<2x32xf32>
    tpu.vector_store %arg14[%c14, %c0_53], %249 {strides = array<i32>} : memref<16x32xf32, #tpu.memory_space<vmem>>, vector<2x32xf32>,
    %c0_54 = arith.constant 0 : index
    %c0_55 = arith.constant 0 : index
    %c0_56 = arith.constant 0 : index
    %251 = vector.load %arg12[%c0_54, %c0_55, %c0_56] : memref<2x2x32xf32, #tpu.memory_space<vmem>>, vector<1x2x32xf32>
    %252 = vector.shape_cast %251 : vector<1x2x32xf32> to vector<2x32xf32>
    %253 = vector.shape_cast %249 : vector<2x32xf32> to vector<1x2x32xf32>
    tpu.vector_store %arg12[%c0_54, %c0_55, %c0_56], %253 {strides = array<i32>} : memref<2x2x32xf32, #tpu.memory_space<vmem>>, vector<1x2x32xf32>,
    %c0_57 = arith.constant 0 : index
    %c0_58 = arith.constant 0 : index
    %c0_59 = arith.constant 0 : index
    %254 = vector.load %arg13[%c0_57, %c0_58, %c0_59] : memref<2x2x32xf32, #tpu.memory_space<vmem>>, vector<1x2x32xf32>
    %255 = vector.shape_cast %254 : vector<1x2x32xf32> to vector<2x32xf32>
    %256 = vector.shape_cast %247 : vector<2x32xf32> to vector<1x2x32xf32>
    tpu.vector_store %arg13[%c0_57, %c0_58, %c0_59], %256 {strides = array<i32>} : memref<2x2x32xf32, #tpu.memory_space<vmem>>, vector<1x2x32xf32>,
    %c0_60 = arith.constant 0 : index
    %c0_61 = arith.constant 0 : index
    %257 = vector.load %arg14[%c0_60, %c0_61] : memref<16x32xf32, #tpu.memory_space<vmem>>, vector<16x32xf32>
    %258 = arith.truncf %257 : vector<16x32xf32> to vector<16x32xbf16>
    %c0_62 = arith.constant 0 : index
    %c0_63 = arith.constant 0 : index
    %259 = vector.load %arg6[%c0_62, %c0_63] : memref<32x128xbf16, #tpu.memory_space<vmem>>, vector<32x128xbf16>
    %c0_64 = arith.constant 0 : index
    %c0_65 = arith.constant 0 : index
    %260 = vector.load %arg7[%c0_64, %c0_65] : memref<32x128xbf16, #tpu.memory_space<vmem>>, vector<32x128xbf16>
    %c0_66 = arith.constant 0 : index
    %c0_67 = arith.constant 0 : index
    %261 = vector.load %arg8[%c0_66, %c0_67] : memref<1x128xf32, #tpu.memory_space<vmem>>, vector<1x128xf32>
    %cst_68 = arith.constant dense<0.000000e+00> : vector<16x128xf32>
    %262 = tpu.matmul %258, %259, %cst_68 {dimension_numbers = #tpu.dot_dimension_numbers<[1], [0], [0], [1], [0, 0, 1, 1], [], []>} : vector<16x32xbf16>, vector<32x128xbf16>, vector<16x128xf32> -> vector<16x128xf32>
    %263 = vector.broadcast %261 : vector<1x128xf32> to vector<16x128xf32>
    %264 = arith.addf %262, %263 : vector<16x128xf32>
    %c1 = arith.constant 1 : index
    %c0_69 = arith.constant 0 : index
    %c0_70 = arith.constant 0 : index
    %265 = vector.load %arg1[%c1, %c0_69, %c0_70] : memref<2x2x32xf32, #tpu.memory_space<vmem>>, vector<1x2x32xf32>
    %266 = vector.shape_cast %265 : vector<1x2x32xf32> to vector<2x32xf32>
    %c1_71 = arith.constant 1 : index
    %c0_72 = arith.constant 0 : index
    %c0_73 = arith.constant 0 : index
    %267 = vector.load %arg2[%c1_71, %c0_72, %c0_73] : memref<2x2x32xf32, #tpu.memory_space<vmem>>, vector<1x2x32xf32>
    %268 = vector.shape_cast %267 : vector<1x2x32xf32> to vector<2x32xf32>
    %269 = vector.extract_strided_slice %264 {offsets = [0, 0], sizes = [2, 128], strides = [1, 1]} : vector<16x128xf32> to vector<2x128xf32>
    %270 = arith.truncf %266 : vector<2x32xf32> to vector<2x32xbf16>
    %cst_74 = arith.constant dense<0.000000e+00> : vector<2x128xf32>
    %271 = tpu.matmul %270, %260, %cst_74 {dimension_numbers = #tpu.dot_dimension_numbers<[1], [0], [0], [1], [0, 0, 1, 1], [], []>} : vector<2x32xbf16>, vector<32x128xbf16>, vector<2x128xf32> -> vector<2x128xf32>
    %272 = arith.addf %269, %271 : vector<2x128xf32>
    %273 = vector.extract_strided_slice %272 {offsets = [0, 0], sizes = [2, 32], strides = [1, 1]} : vector<2x128xf32> to vector<2x32xf32>
    %274 = arith.negf %273 : vector<2x32xf32>
    %275 = math.exp %274 : vector<2x32xf32>
    %cst_75 = arith.constant 1.000000e+00 : f32
    %276 = vector.broadcast %cst_75 : f32 to vector<2x32xf32>
    %277 = arith.addf %276, %275 : vector<2x32xf32>
    %278 = arith.divf %276, %277 : vector<2x32xf32>
    %279 = vector.extract_strided_slice %272 {offsets = [0, 32], sizes = [2, 32], strides = [1, 1]} : vector<2x128xf32> to vector<2x32xf32>
    %280 = arith.negf %279 : vector<2x32xf32>
    %281 = math.exp %280 : vector<2x32xf32>
    %cst_76 = arith.constant 1.000000e+00 : f32
    %282 = vector.broadcast %cst_76 : f32 to vector<2x32xf32>
    %283 = arith.addf %282, %281 : vector<2x32xf32>
    %284 = arith.divf %282, %283 : vector<2x32xf32>
    %285 = vector.extract_strided_slice %272 {offsets = [0, 64], sizes = [2, 32], strides = [1, 1]} : vector<2x128xf32> to vector<2x32xf32>
    %286 = math.tanh %285 : vector<2x32xf32>
    %287 = vector.extract_strided_slice %272 {offsets = [0, 96], sizes = [2, 32], strides = [1, 1]} : vector<2x128xf32> to vector<2x32xf32>
    %288 = arith.negf %287 : vector<2x32xf32>
    %289 = math.exp %288 : vector<2x32xf32>
    %cst_77 = arith.constant 1.000000e+00 : f32
    %290 = vector.broadcast %cst_77 : f32 to vector<2x32xf32>
    %291 = arith.addf %290, %289 : vector<2x32xf32>
    %292 = arith.divf %290, %291 : vector<2x32xf32>
    %293 = arith.mulf %284, %268 : vector<2x32xf32>
    %294 = arith.mulf %278, %286 : vector<2x32xf32>
    %295 = arith.addf %293, %294 : vector<2x32xf32>
    %296 = math.tanh %295 : vector<2x32xf32>
    %297 = arith.mulf %292, %296 : vector<2x32xf32>
    %c0_78 = arith.constant 0 : index
    %c0_79 = arith.constant 0 : index
    %298 = vector.load %arg14[%c0_78, %c0_79] : memref<16x32xf32, #tpu.memory_space<vmem>>, vector<2x32xf32>
    tpu.vector_store %arg14[%c0_78, %c0_79], %297 {strides = array<i32>} : memref<16x32xf32, #tpu.memory_space<vmem>>, vector<2x32xf32>,
    %299 = vector.extract_strided_slice %264 {offsets = [2, 0], sizes = [2, 128], strides = [1, 1]} : vector<16x128xf32> to vector<2x128xf32>
    %300 = arith.truncf %297 : vector<2x32xf32> to vector<2x32xbf16>
    %cst_80 = arith.constant dense<0.000000e+00> : vector<2x128xf32>
    %301 = tpu.matmul %300, %260, %cst_80 {dimension_numbers = #tpu.dot_dimension_numbers<[1], [0], [0], [1], [0, 0, 1, 1], [], []>} : vector<2x32xbf16>, vector<32x128xbf16>, vector<2x128xf32> -> vector<2x128xf32>
    %302 = arith.addf %299, %301 : vector<2x128xf32>
    %303 = vector.extract_strided_slice %302 {offsets = [0, 0], sizes = [2, 32], strides = [1, 1]} : vector<2x128xf32> to vector<2x32xf32>
    %304 = arith.negf %303 : vector<2x32xf32>
    %305 = math.exp %304 : vector<2x32xf32>
    %cst_81 = arith.constant 1.000000e+00 : f32
    %306 = vector.broadcast %cst_81 : f32 to vector<2x32xf32>
    %307 = arith.addf %306, %305 : vector<2x32xf32>
    %308 = arith.divf %306, %307 : vector<2x32xf32>
    %309 = vector.extract_strided_slice %302 {offsets = [0, 32], sizes = [2, 32], strides = [1, 1]} : vector<2x128xf32> to vector<2x32xf32>
    %310 = arith.negf %309 : vector<2x32xf32>
    %311 = math.exp %310 : vector<2x32xf32>
    %cst_82 = arith.constant 1.000000e+00 : f32
    %312 = vector.broadcast %cst_82 : f32 to vector<2x32xf32>
    %313 = arith.addf %312, %311 : vector<2x32xf32>
    %314 = arith.divf %312, %313 : vector<2x32xf32>
    %315 = vector.extract_strided_slice %302 {offsets = [0, 64], sizes = [2, 32], strides = [1, 1]} : vector<2x128xf32> to vector<2x32xf32>
    %316 = math.tanh %315 : vector<2x32xf32>
    %317 = vector.extract_strided_slice %302 {offsets = [0, 96], sizes = [2, 32], strides = [1, 1]} : vector<2x128xf32> to vector<2x32xf32>
    %318 = arith.negf %317 : vector<2x32xf32>
    %319 = math.exp %318 : vector<2x32xf32>
    %cst_83 = arith.constant 1.000000e+00 : f32
    %320 = vector.broadcast %cst_83 : f32 to vector<2x32xf32>
    %321 = arith.addf %320, %319 : vector<2x32xf32>
    %322 = arith.divf %320, %321 : vector<2x32xf32>
    %323 = arith.mulf %314, %295 : vector<2x32xf32>
    %324 = arith.mulf %308, %316 : vector<2x32xf32>
    %325 = arith.addf %323, %324 : vector<2x32xf32>
    %326 = math.tanh %325 : vector<2x32xf32>
    %327 = arith.mulf %322, %326 : vector<2x32xf32>
    %c2_84 = arith.constant 2 : index
    %c0_85 = arith.constant 0 : index
    %328 = vector.load %arg14[%c2_84, %c0_85] : memref<16x32xf32, #tpu.memory_space<vmem>>, vector<2x32xf32>
    tpu.vector_store %arg14[%c2_84, %c0_85], %327 {strides = array<i32>} : memref<16x32xf32, #tpu.memory_space<vmem>>, vector<2x32xf32>,
    %329 = vector.extract_strided_slice %264 {offsets = [4, 0], sizes = [2, 128], strides = [1, 1]} : vector<16x128xf32> to vector<2x128xf32>
    %330 = arith.truncf %327 : vector<2x32xf32> to vector<2x32xbf16>
    %cst_86 = arith.constant dense<0.000000e+00> : vector<2x128xf32>
    %331 = tpu.matmul %330, %260, %cst_86 {dimension_numbers = #tpu.dot_dimension_numbers<[1], [0], [0], [1], [0, 0, 1, 1], [], []>} : vector<2x32xbf16>, vector<32x128xbf16>, vector<2x128xf32> -> vector<2x128xf32>
    %332 = arith.addf %329, %331 : vector<2x128xf32>
    %333 = vector.extract_strided_slice %332 {offsets = [0, 0], sizes = [2, 32], strides = [1, 1]} : vector<2x128xf32> to vector<2x32xf32>
    %334 = arith.negf %333 : vector<2x32xf32>
    %335 = math.exp %334 : vector<2x32xf32>
    %cst_87 = arith.constant 1.000000e+00 : f32
    %336 = vector.broadcast %cst_87 : f32 to vector<2x32xf32>
    %337 = arith.addf %336, %335 : vector<2x32xf32>
    %338 = arith.divf %336, %337 : vector<2x32xf32>
    %339 = vector.extract_strided_slice %332 {offsets = [0, 32], sizes = [2, 32], strides = [1, 1]} : vector<2x128xf32> to vector<2x32xf32>
    %340 = arith.negf %339 : vector<2x32xf32>
    %341 = math.exp %340 : vector<2x32xf32>
    %cst_88 = arith.constant 1.000000e+00 : f32
    %342 = vector.broadcast %cst_88 : f32 to vector<2x32xf32>
    %343 = arith.addf %342, %341 : vector<2x32xf32>
    %344 = arith.divf %342, %343 : vector<2x32xf32>
    %345 = vector.extract_strided_slice %332 {offsets = [0, 64], sizes = [2, 32], strides = [1, 1]} : vector<2x128xf32> to vector<2x32xf32>
    %346 = math.tanh %345 : vector<2x32xf32>
    %347 = vector.extract_strided_slice %332 {offsets = [0, 96], sizes = [2, 32], strides = [1, 1]} : vector<2x128xf32> to vector<2x32xf32>
    %348 = arith.negf %347 : vector<2x32xf32>
    %349 = math.exp %348 : vector<2x32xf32>
    %cst_89 = arith.constant 1.000000e+00 : f32
    %350 = vector.broadcast %cst_89 : f32 to vector<2x32xf32>
    %351 = arith.addf %350, %349 : vector<2x32xf32>
    %352 = arith.divf %350, %351 : vector<2x32xf32>
    %353 = arith.mulf %344, %325 : vector<2x32xf32>
    %354 = arith.mulf %338, %346 : vector<2x32xf32>
    %355 = arith.addf %353, %354 : vector<2x32xf32>
    %356 = math.tanh %355 : vector<2x32xf32>
    %357 = arith.mulf %352, %356 : vector<2x32xf32>
    %c4_90 = arith.constant 4 : index
    %c0_91 = arith.constant 0 : index
    %358 = vector.load %arg14[%c4_90, %c0_91] : memref<16x32xf32, #tpu.memory_space<vmem>>, vector<2x32xf32>
    tpu.vector_store %arg14[%c4_90, %c0_91], %357 {strides = array<i32>} : memref<16x32xf32, #tpu.memory_space<vmem>>, vector<2x32xf32>,
    %359 = vector.extract_strided_slice %264 {offsets = [6, 0], sizes = [2, 128], strides = [1, 1]} : vector<16x128xf32> to vector<2x128xf32>
    %360 = arith.truncf %357 : vector<2x32xf32> to vector<2x32xbf16>
    %cst_92 = arith.constant dense<0.000000e+00> : vector<2x128xf32>
    %361 = tpu.matmul %360, %260, %cst_92 {dimension_numbers = #tpu.dot_dimension_numbers<[1], [0], [0], [1], [0, 0, 1, 1], [], []>} : vector<2x32xbf16>, vector<32x128xbf16>, vector<2x128xf32> -> vector<2x128xf32>
    %362 = arith.addf %359, %361 : vector<2x128xf32>
    %363 = vector.extract_strided_slice %362 {offsets = [0, 0], sizes = [2, 32], strides = [1, 1]} : vector<2x128xf32> to vector<2x32xf32>
    %364 = arith.negf %363 : vector<2x32xf32>
    %365 = math.exp %364 : vector<2x32xf32>
    %cst_93 = arith.constant 1.000000e+00 : f32
    %366 = vector.broadcast %cst_93 : f32 to vector<2x32xf32>
    %367 = arith.addf %366, %365 : vector<2x32xf32>
    %368 = arith.divf %366, %367 : vector<2x32xf32>
    %369 = vector.extract_strided_slice %362 {offsets = [0, 32], sizes = [2, 32], strides = [1, 1]} : vector<2x128xf32> to vector<2x32xf32>
    %370 = arith.negf %369 : vector<2x32xf32>
    %371 = math.exp %370 : vector<2x32xf32>
    %cst_94 = arith.constant 1.000000e+00 : f32
    %372 = vector.broadcast %cst_94 : f32 to vector<2x32xf32>
    %373 = arith.addf %372, %371 : vector<2x32xf32>
    %374 = arith.divf %372, %373 : vector<2x32xf32>
    %375 = vector.extract_strided_slice %362 {offsets = [0, 64], sizes = [2, 32], strides = [1, 1]} : vector<2x128xf32> to vector<2x32xf32>
    %376 = math.tanh %375 : vector<2x32xf32>
    %377 = vector.extract_strided_slice %362 {offsets = [0, 96], sizes = [2, 32], strides = [1, 1]} : vector<2x128xf32> to vector<2x32xf32>
    %378 = arith.negf %377 : vector<2x32xf32>
    %379 = math.exp %378 : vector<2x32xf32>
    %cst_95 = arith.constant 1.000000e+00 : f32
    %380 = vector.broadcast %cst_95 : f32 to vector<2x32xf32>
    %381 = arith.addf %380, %379 : vector<2x32xf32>
    %382 = arith.divf %380, %381 : vector<2x32xf32>
    %383 = arith.mulf %374, %355 : vector<2x32xf32>
    %384 = arith.mulf %368, %376 : vector<2x32xf32>
    %385 = arith.addf %383, %384 : vector<2x32xf32>
    %386 = math.tanh %385 : vector<2x32xf32>
    %387 = arith.mulf %382, %386 : vector<2x32xf32>
    %c6_96 = arith.constant 6 : index
    %c0_97 = arith.constant 0 : index
    %388 = vector.load %arg14[%c6_96, %c0_97] : memref<16x32xf32, #tpu.memory_space<vmem>>, vector<2x32xf32>
    tpu.vector_store %arg14[%c6_96, %c0_97], %387 {strides = array<i32>} : memref<16x32xf32, #tpu.memory_space<vmem>>, vector<2x32xf32>,
    %389 = vector.extract_strided_slice %264 {offsets = [8, 0], sizes = [2, 128], strides = [1, 1]} : vector<16x128xf32> to vector<2x128xf32>
    %390 = arith.truncf %387 : vector<2x32xf32> to vector<2x32xbf16>
    %cst_98 = arith.constant dense<0.000000e+00> : vector<2x128xf32>
    %391 = tpu.matmul %390, %260, %cst_98 {dimension_numbers = #tpu.dot_dimension_numbers<[1], [0], [0], [1], [0, 0, 1, 1], [], []>} : vector<2x32xbf16>, vector<32x128xbf16>, vector<2x128xf32> -> vector<2x128xf32>
    %392 = arith.addf %389, %391 : vector<2x128xf32>
    %393 = vector.extract_strided_slice %392 {offsets = [0, 0], sizes = [2, 32], strides = [1, 1]} : vector<2x128xf32> to vector<2x32xf32>
    %394 = arith.negf %393 : vector<2x32xf32>
    %395 = math.exp %394 : vector<2x32xf32>
    %cst_99 = arith.constant 1.000000e+00 : f32
    %396 = vector.broadcast %cst_99 : f32 to vector<2x32xf32>
    %397 = arith.addf %396, %395 : vector<2x32xf32>
    %398 = arith.divf %396, %397 : vector<2x32xf32>
    %399 = vector.extract_strided_slice %392 {offsets = [0, 32], sizes = [2, 32], strides = [1, 1]} : vector<2x128xf32> to vector<2x32xf32>
    %400 = arith.negf %399 : vector<2x32xf32>
    %401 = math.exp %400 : vector<2x32xf32>
    %cst_100 = arith.constant 1.000000e+00 : f32
    %402 = vector.broadcast %cst_100 : f32 to vector<2x32xf32>
    %403 = arith.addf %402, %401 : vector<2x32xf32>
    %404 = arith.divf %402, %403 : vector<2x32xf32>
    %405 = vector.extract_strided_slice %392 {offsets = [0, 64], sizes = [2, 32], strides = [1, 1]} : vector<2x128xf32> to vector<2x32xf32>
    %406 = math.tanh %405 : vector<2x32xf32>
    %407 = vector.extract_strided_slice %392 {offsets = [0, 96], sizes = [2, 32], strides = [1, 1]} : vector<2x128xf32> to vector<2x32xf32>
    %408 = arith.negf %407 : vector<2x32xf32>
    %409 = math.exp %408 : vector<2x32xf32>
    %cst_101 = arith.constant 1.000000e+00 : f32
    %410 = vector.broadcast %cst_101 : f32 to vector<2x32xf32>
    %411 = arith.addf %410, %409 : vector<2x32xf32>
    %412 = arith.divf %410, %411 : vector<2x32xf32>
    %413 = arith.mulf %404, %385 : vector<2x32xf32>
    %414 = arith.mulf %398, %406 : vector<2x32xf32>
    %415 = arith.addf %413, %414 : vector<2x32xf32>
    %416 = math.tanh %415 : vector<2x32xf32>
    %417 = arith.mulf %412, %416 : vector<2x32xf32>
    %c8_102 = arith.constant 8 : index
    %c0_103 = arith.constant 0 : index
    %418 = vector.load %arg14[%c8_102, %c0_103] : memref<16x32xf32, #tpu.memory_space<vmem>>, vector<2x32xf32>
    tpu.vector_store %arg14[%c8_102, %c0_103], %417 {strides = array<i32>} : memref<16x32xf32, #tpu.memory_space<vmem>>, vector<2x32xf32>,
    %419 = vector.extract_strided_slice %264 {offsets = [10, 0], sizes = [2, 128], strides = [1, 1]} : vector<16x128xf32> to vector<2x128xf32>
    %420 = arith.truncf %417 : vector<2x32xf32> to vector<2x32xbf16>
    %cst_104 = arith.constant dense<0.000000e+00> : vector<2x128xf32>
    %421 = tpu.matmul %420, %260, %cst_104 {dimension_numbers = #tpu.dot_dimension_numbers<[1], [0], [0], [1], [0, 0, 1, 1], [], []>} : vector<2x32xbf16>, vector<32x128xbf16>, vector<2x128xf32> -> vector<2x128xf32>
    %422 = arith.addf %419, %421 : vector<2x128xf32>
    %423 = vector.extract_strided_slice %422 {offsets = [0, 0], sizes = [2, 32], strides = [1, 1]} : vector<2x128xf32> to vector<2x32xf32>
    %424 = arith.negf %423 : vector<2x32xf32>
    %425 = math.exp %424 : vector<2x32xf32>
    %cst_105 = arith.constant 1.000000e+00 : f32
    %426 = vector.broadcast %cst_105 : f32 to vector<2x32xf32>
    %427 = arith.addf %426, %425 : vector<2x32xf32>
    %428 = arith.divf %426, %427 : vector<2x32xf32>
    %429 = vector.extract_strided_slice %422 {offsets = [0, 32], sizes = [2, 32], strides = [1, 1]} : vector<2x128xf32> to vector<2x32xf32>
    %430 = arith.negf %429 : vector<2x32xf32>
    %431 = math.exp %430 : vector<2x32xf32>
    %cst_106 = arith.constant 1.000000e+00 : f32
    %432 = vector.broadcast %cst_106 : f32 to vector<2x32xf32>
    %433 = arith.addf %432, %431 : vector<2x32xf32>
    %434 = arith.divf %432, %433 : vector<2x32xf32>
    %435 = vector.extract_strided_slice %422 {offsets = [0, 64], sizes = [2, 32], strides = [1, 1]} : vector<2x128xf32> to vector<2x32xf32>
    %436 = math.tanh %435 : vector<2x32xf32>
    %437 = vector.extract_strided_slice %422 {offsets = [0, 96], sizes = [2, 32], strides = [1, 1]} : vector<2x128xf32> to vector<2x32xf32>
    %438 = arith.negf %437 : vector<2x32xf32>
    %439 = math.exp %438 : vector<2x32xf32>
    %cst_107 = arith.constant 1.000000e+00 : f32
    %440 = vector.broadcast %cst_107 : f32 to vector<2x32xf32>
    %441 = arith.addf %440, %439 : vector<2x32xf32>
    %442 = arith.divf %440, %441 : vector<2x32xf32>
    %443 = arith.mulf %434, %415 : vector<2x32xf32>
    %444 = arith.mulf %428, %436 : vector<2x32xf32>
    %445 = arith.addf %443, %444 : vector<2x32xf32>
    %446 = math.tanh %445 : vector<2x32xf32>
    %447 = arith.mulf %442, %446 : vector<2x32xf32>
    %c10_108 = arith.constant 10 : index
    %c0_109 = arith.constant 0 : index
    %448 = vector.load %arg14[%c10_108, %c0_109] : memref<16x32xf32, #tpu.memory_space<vmem>>, vector<2x32xf32>
    tpu.vector_store %arg14[%c10_108, %c0_109], %447 {strides = array<i32>} : memref<16x32xf32, #tpu.memory_space<vmem>>, vector<2x32xf32>,
    %449 = vector.extract_strided_slice %264 {offsets = [12, 0], sizes = [2, 128], strides = [1, 1]} : vector<16x128xf32> to vector<2x128xf32>
    %450 = arith.truncf %447 : vector<2x32xf32> to vector<2x32xbf16>
    %cst_110 = arith.constant dense<0.000000e+00> : vector<2x128xf32>
    %451 = tpu.matmul %450, %260, %cst_110 {dimension_numbers = #tpu.dot_dimension_numbers<[1], [0], [0], [1], [0, 0, 1, 1], [], []>} : vector<2x32xbf16>, vector<32x128xbf16>, vector<2x128xf32> -> vector<2x128xf32>
    %452 = arith.addf %449, %451 : vector<2x128xf32>
    %453 = vector.extract_strided_slice %452 {offsets = [0, 0], sizes = [2, 32], strides = [1, 1]} : vector<2x128xf32> to vector<2x32xf32>
    %454 = arith.negf %453 : vector<2x32xf32>
    %455 = math.exp %454 : vector<2x32xf32>
    %cst_111 = arith.constant 1.000000e+00 : f32
    %456 = vector.broadcast %cst_111 : f32 to vector<2x32xf32>
    %457 = arith.addf %456, %455 : vector<2x32xf32>
    %458 = arith.divf %456, %457 : vector<2x32xf32>
    %459 = vector.extract_strided_slice %452 {offsets = [0, 32], sizes = [2, 32], strides = [1, 1]} : vector<2x128xf32> to vector<2x32xf32>
    %460 = arith.negf %459 : vector<2x32xf32>
    %461 = math.exp %460 : vector<2x32xf32>
    %cst_112 = arith.constant 1.000000e+00 : f32
    %462 = vector.broadcast %cst_112 : f32 to vector<2x32xf32>
    %463 = arith.addf %462, %461 : vector<2x32xf32>
    %464 = arith.divf %462, %463 : vector<2x32xf32>
    %465 = vector.extract_strided_slice %452 {offsets = [0, 64], sizes = [2, 32], strides = [1, 1]} : vector<2x128xf32> to vector<2x32xf32>
    %466 = math.tanh %465 : vector<2x32xf32>
    %467 = vector.extract_strided_slice %452 {offsets = [0, 96], sizes = [2, 32], strides = [1, 1]} : vector<2x128xf32> to vector<2x32xf32>
    %468 = arith.negf %467 : vector<2x32xf32>
    %469 = math.exp %468 : vector<2x32xf32>
    %cst_113 = arith.constant 1.000000e+00 : f32
    %470 = vector.broadcast %cst_113 : f32 to vector<2x32xf32>
    %471 = arith.addf %470, %469 : vector<2x32xf32>
    %472 = arith.divf %470, %471 : vector<2x32xf32>
    %473 = arith.mulf %464, %445 : vector<2x32xf32>
    %474 = arith.mulf %458, %466 : vector<2x32xf32>
    %475 = arith.addf %473, %474 : vector<2x32xf32>
    %476 = math.tanh %475 : vector<2x32xf32>
    %477 = arith.mulf %472, %476 : vector<2x32xf32>
    %c12_114 = arith.constant 12 : index
    %c0_115 = arith.constant 0 : index
    %478 = vector.load %arg14[%c12_114, %c0_115] : memref<16x32xf32, #tpu.memory_space<vmem>>, vector<2x32xf32>
    tpu.vector_store %arg14[%c12_114, %c0_115], %477 {strides = array<i32>} : memref<16x32xf32, #tpu.memory_space<vmem>>, vector<2x32xf32>,
    %479 = vector.extract_strided_slice %264 {offsets = [14, 0], sizes = [2, 128], strides = [1, 1]} : vector<16x128xf32> to vector<2x128xf32>
    %480 = arith.truncf %477 : vector<2x32xf32> to vector<2x32xbf16>
    %cst_116 = arith.constant dense<0.000000e+00> : vector<2x128xf32>
    %481 = tpu.matmul %480, %260, %cst_116 {dimension_numbers = #tpu.dot_dimension_numbers<[1], [0], [0], [1], [0, 0, 1, 1], [], []>} : vector<2x32xbf16>, vector<32x128xbf16>, vector<2x128xf32> -> vector<2x128xf32>
    %482 = arith.addf %479, %481 : vector<2x128xf32>
    %483 = vector.extract_strided_slice %482 {offsets = [0, 0], sizes = [2, 32], strides = [1, 1]} : vector<2x128xf32> to vector<2x32xf32>
    %484 = arith.negf %483 : vector<2x32xf32>
    %485 = math.exp %484 : vector<2x32xf32>
    %cst_117 = arith.constant 1.000000e+00 : f32
    %486 = vector.broadcast %cst_117 : f32 to vector<2x32xf32>
    %487 = arith.addf %486, %485 : vector<2x32xf32>
    %488 = arith.divf %486, %487 : vector<2x32xf32>
    %489 = vector.extract_strided_slice %482 {offsets = [0, 32], sizes = [2, 32], strides = [1, 1]} : vector<2x128xf32> to vector<2x32xf32>
    %490 = arith.negf %489 : vector<2x32xf32>
    %491 = math.exp %490 : vector<2x32xf32>
    %cst_118 = arith.constant 1.000000e+00 : f32
    %492 = vector.broadcast %cst_118 : f32 to vector<2x32xf32>
    %493 = arith.addf %492, %491 : vector<2x32xf32>
    %494 = arith.divf %492, %493 : vector<2x32xf32>
    %495 = vector.extract_strided_slice %482 {offsets = [0, 64], sizes = [2, 32], strides = [1, 1]} : vector<2x128xf32> to vector<2x32xf32>
    %496 = math.tanh %495 : vector<2x32xf32>
    %497 = vector.extract_strided_slice %482 {offsets = [0, 96], sizes = [2, 32], strides = [1, 1]} : vector<2x128xf32> to vector<2x32xf32>
    %498 = arith.negf %497 : vector<2x32xf32>
    %499 = math.exp %498 : vector<2x32xf32>
    %cst_119 = arith.constant 1.000000e+00 : f32
    %500 = vector.broadcast %cst_119 : f32 to vector<2x32xf32>
    %501 = arith.addf %500, %499 : vector<2x32xf32>
    %502 = arith.divf %500, %501 : vector<2x32xf32>
    %503 = arith.mulf %494, %475 : vector<2x32xf32>
    %504 = arith.mulf %488, %496 : vector<2x32xf32>
    %505 = arith.addf %503, %504 : vector<2x32xf32>
    %506 = math.tanh %505 : vector<2x32xf32>
    %507 = arith.mulf %502, %506 : vector<2x32xf32>
    %c14_120 = arith.constant 14 : index
    %c0_121 = arith.constant 0 : index
    %508 = vector.load %arg14[%c14_120, %c0_121] : memref<16x32xf32, #tpu.memory_space<vmem>>, vector<2x32xf32>
    tpu.vector_store %arg14[%c14_120, %c0_121], %507 {strides = array<i32>} : memref<16x32xf32, #tpu.memory_space<vmem>>, vector<2x32xf32>,
    %c1_122 = arith.constant 1 : index
    %c0_123 = arith.constant 0 : index
    %c0_124 = arith.constant 0 : index
    %509 = vector.load %arg12[%c1_122, %c0_123, %c0_124] : memref<2x2x32xf32, #tpu.memory_space<vmem>>, vector<1x2x32xf32>
    %510 = vector.shape_cast %509 : vector<1x2x32xf32> to vector<2x32xf32>
    %511 = vector.shape_cast %507 : vector<2x32xf32> to vector<1x2x32xf32>
    tpu.vector_store %arg12[%c1_122, %c0_123, %c0_124], %511 {strides = array<i32>} : memref<2x2x32xf32, #tpu.memory_space<vmem>>, vector<1x2x32xf32>,
    %c1_125 = arith.constant 1 : index
    %c0_126 = arith.constant 0 : index
    %c0_127 = arith.constant 0 : index
    %512 = vector.load %arg13[%c1_125, %c0_126, %c0_127] : memref<2x2x32xf32, #tpu.memory_space<vmem>>, vector<1x2x32xf32>
    %513 = vector.shape_cast %512 : vector<1x2x32xf32> to vector<2x32xf32>
    %514 = vector.shape_cast %505 : vector<2x32xf32> to vector<1x2x32xf32>
    tpu.vector_store %arg13[%c1_125, %c0_126, %c0_127], %514 {strides = array<i32>} : memref<2x2x32xf32, #tpu.memory_space<vmem>>, vector<1x2x32xf32>,
    %c0_128 = arith.constant 0 : index
    %c0_129 = arith.constant 0 : index
    %515 = vector.load %arg14[%c0_128, %c0_129] : memref<16x32xf32, #tpu.memory_space<vmem>>, vector<16x32xf32>
    %516 = arith.truncf %515 : vector<16x32xf32> to vector<16x32xbf16>
    %c0_130 = arith.constant 0 : index
    %c0_131 = arith.constant 0 : index
    %517 = vector.load %arg9[%c0_130, %c0_131] : memref<32x16xbf16, #tpu.memory_space<vmem>>, vector<32x16xbf16>
    %cst_132 = arith.constant dense<0.000000e+00> : vector<16x16xf32>
    %518 = tpu.matmul %516, %517, %cst_132 {dimension_numbers = #tpu.dot_dimension_numbers<[1], [0], [0], [1], [0, 0, 1, 1], [], []>} : vector<16x32xbf16>, vector<32x16xbf16>, vector<16x16xf32> -> vector<16x16xf32>
    %c0_133 = arith.constant 0 : index
    %c0_134 = arith.constant 0 : index
    %519 = vector.load %arg10[%c0_133, %c0_134] : memref<1x16xf32, #tpu.memory_space<vmem>>, vector<1x16xf32>
    %520 = vector.broadcast %519 : vector<1x16xf32> to vector<16x16xf32>
    %521 = arith.addf %518, %520 : vector<16x16xf32>
    %c0_135 = arith.constant 0 : index
    %c0_136 = arith.constant 0 : index
    %522 = vector.load %arg11[%c0_135, %c0_136] : memref<16x16xf32, #tpu.memory_space<vmem>>, vector<16x16xf32>
    tpu.vector_store %arg11[%c0_135, %c0_136], %521 {strides = array<i32>} : memref<16x16xf32, #tpu.memory_space<vmem>>, vector<16x16xf32>,
    return
  }
}

</mosaic_0001>

<llo_original>
// kernel: rnn_forward.1
$region0: #{rnn_forward.1}
  #allocation0 [shape = 'u32[]', space=smem, size = 0x4, offset = 0x4, fixed_abs, tag = 'smem constant byte address 0x4 - core index']
  #allocation1 [shape = 'u32[72,128]{1,0:T(1,128)}', space=vmem, size = 0x9000, scoped, tag = 'internal scratch']
  #allocation2 [shape = 'f32[16,32]{1,0:T(8,128)}', space=vmem, size = 0x2000, scoped, tag = 'scratch operand']
  %s0 = inlined_call_operand.vmem [shape: bf16[16,16], index: 0, kind: input, shape index: {}]
  %s1 = inlined_call_operand.hbm [shape: f32[2,2,32], index: 1, kind: input, shape index: {}]
  %s2 = inlined_call_operand.hbm [shape: f32[2,2,32], index: 2, kind: input, shape index: {}]
  %s3 = inlined_call_operand.vmem [shape: bf16[16,128], index: 3, kind: input, shape index: {}]
  %s4 = inlined_call_operand.vmem [shape: bf16[32,128], index: 4, kind: input, shape index: {}]
  %s5 = inlined_call_operand.vmem [shape: f32[1,128], index: 5, kind: input, shape index: {}]
  %s6 = inlined_call_operand.vmem [shape: bf16[32,128], index: 6, kind: input, shape index: {}]
  %s7 = inlined_call_operand.hbm [shape: bf16[32,128], index: 7, kind: input, shape index: {}]
  %s8 = inlined_call_operand.vmem [shape: f32[1,128], index: 8, kind: input, shape index: {}]
  %s9 = inlined_call_operand.hbm [shape: bf16[32,16], index: 9, kind: input, shape index: {}]
  %s10 = inlined_call_operand.vmem [shape: f32[1,16], index: 10, kind: input, shape index: {}]
  %s11 = inlined_call_operand.vmem [shape: f32[16,16], index: 11, kind: output, shape index: {0}]
  %s12 = inlined_call_operand.hbm [shape: f32[2,2,32], index: 12, kind: output, shape index: {1}]
  %s13 = inlined_call_operand.hbm [shape: f32[2,2,32], index: 13, kind: output, shape index: {2}]
  %14 = xla_tuple %s11, %s12, %s13
  %s15 = sld [smem:[#allocation0]]
  $region86: #{rnn_forward.1} parent=0
    _
  %s17 = ssub.s32 1, %s15
  %s18 = scalar_select 0, %s17, %s15
  $region1: #{rnn_forward.1} parent=0
    #allocation3 [shape = 'u8[2048]{0}', space=vmem, size = 0x800, scoped, tag = 'input window, operand 1, single buffered']
    #allocation4 [shape = 's32[1]{0}', space=sflag, size = 0x4, scoped, tag = 'scoped memory for rnn_forward.1']
    #allocation5 [shape = 's32[1]{0}', space=sflag, size = 0x4, scoped, tag = 'scoped memory for rnn_forward.1']
    #allocation6 [shape = 'u8[2048]{0}', space=vmem, size = 0x800, scoped, tag = 'input window, operand 2, single buffered']
    #allocation7 [shape = 's32[1]{0}', space=sflag, size = 0x4, scoped, tag = 'scoped memory for rnn_forward.1']
    #allocation8 [shape = 'u8[8192]{0}', space=vmem, size = 0x2000, scoped, tag = 'input window, operand 7, single buffered']
    #allocation9 [shape = 'u8[8192]{0}', space=vmem, size = 0x2000, scoped, tag = 'input window, operand 9, single buffered']
    #allocation10 [shape = 's32[1]{0}', space=sflag, size = 0x4, scoped, tag = 'scoped memory for rnn_forward.1']
    #allocation11 [shape = 'u8[2048]{0}', space=vmem, size = 0x800, scoped, tag = 'output window, operand 1, single buffered']
    #allocation12 [shape = 'u8[2048]{0}', space=vmem, size = 0x800, scoped, tag = 'output window, operand 2, single buffered']
    #allocation13 [shape = 's32[1]{0}', space=sflag, size = 0x4, scoped, tag = 'scoped memory for rnn_forward.1']
    %19 = vsyncpa [#allocation4], 0
    %20 = vsyncpa [#allocation7], 0
    %21 = vsyncpa [#allocation10], 0
    %22 = vsyncpa [#allocation5], 0
    %23 = vsyncpa [#allocation13], 0
    // Predicated region
    $region2: #{rnn_forward.1} parent=1 // pred_check
      _
    $region3: #{rnn_forward.1} parent=1 // pred_check_branch
      %25 = sbr.rel (0) target = $region5
    $region4: #{rnn_forward.1} parent=1 // pred_region
      _
    $region5: #{rnn_forward.1} parent=1 // pred_fallthru
      _
    // Predicated region
    $region6: #{rnn_forward.1} parent=1 // pred_check
      _
    $region7: #{rnn_forward.1} parent=1 // pred_check_branch
      %27 = sbr.rel (0) target = $region9
    $region8: #{rnn_forward.1} parent=1 // pred_region
      %29 = vsyncadd [#allocation4], 0
      %s30 = sshll.u32 %s1, 4
      %s31 = int_to_ptr.hbm [resolvable:$true] %s30
      %s32 = sshll.u32 [#allocation3], 4
      %s33 = int_to_ptr.vmem [resolvable:$true] %s32
      %38 = dma.hbm_to_vmem [thread:$0]  %s31, 64, %s33, [#allocation4], 32, 32, 2
    $region9: #{rnn_forward.1} parent=1 // pred_fallthru
      _
    // Predicated region
    $region10: #{rnn_forward.1} parent=1 // pred_check
      _
    $region11: #{rnn_forward.1} parent=1 // pred_check_branch
      %40 = sbr.rel (0) target = $region13
    $region12: #{rnn_forward.1} parent=1 // pred_region
      %42 = vsyncadd [#allocation7], 0
      %s43 = sshll.u32 %s2, 4
      %s44 = int_to_ptr.hbm [resolvable:$true] %s43
      %s45 = sshll.u32 [#allocation6], 4
      %s46 = int_to_ptr.vmem [resolvable:$true] %s45
      %51 = dma.hbm_to_vmem [thread:$0]  %s44, 64, %s46, [#allocation7], 32, 32, 2
    $region13: #{rnn_forward.1} parent=1 // pred_fallthru
      _
    // Predicated region
    $region14: #{rnn_forward.1} parent=1 // pred_check
      _
    $region15: #{rnn_forward.1} parent=1 // pred_check_branch
      %53 = sbr.rel (0) target = $region17
    $region16: #{rnn_forward.1} parent=1 // pred_region
      _
    $region17: #{rnn_forward.1} parent=1 // pred_fallthru
      _
    // Predicated region
    $region18: #{rnn_forward.1} parent=1 // pred_check
      _
    $region19: #{rnn_forward.1} parent=1 // pred_check_branch
      %55 = sbr.rel (0) target = $region21
    $region20: #{rnn_forward.1} parent=1 // pred_region
      _
    $region21: #{rnn_forward.1} parent=1 // pred_fallthru
      _
    // Predicated region
    $region22: #{rnn_forward.1} parent=1 // pred_check
      _
    $region23: #{rnn_forward.1} parent=1 // pred_check_branch
      %57 = sbr.rel (0) target = $region25
    $region24: #{rnn_forward.1} parent=1 // pred_region
      _
    $region25: #{rnn_forward.1} parent=1 // pred_fallthru
      _
    // Predicated region
    $region26: #{rnn_forward.1} parent=1 // pred_check
      _
    $region27: #{rnn_forward.1} parent=1 // pred_check_branch
      %59 = sbr.rel (0) target = $region29
    $region28: #{rnn_forward.1} parent=1 // pred_region
      _
    $region29: #{rnn_forward.1} parent=1 // pred_fallthru
      _
    // Predicated region
    $region30: #{rnn_forward.1} parent=1 // pred_check
      _
    $region31: #{rnn_forward.1} parent=1 // pred_check_branch
      %61 = sbr.rel (0) target = $region33
    $region32: #{rnn_forward.1} parent=1 // pred_region
      %63 = vsyncadd [#allocation7], 0
      %s64 = sshll.u32 %s7, 4
      %s65 = int_to_ptr.hbm [resolvable:$true] %s64
      %s66 = sshll.u32 [#allocation8], 4
      %s67 = int_to_ptr.vmem [resolvable:$true] %s66
      %72 = dma.hbm_to_vmem [thread:$0]  %s65, 256, %s67, [#allocation7], 64, 64, 4
    $region33: #{rnn_forward.1} parent=1 // pred_fallthru
      _
    // Predicated region
    $region34: #{rnn_forward.1} parent=1 // pred_check
      _
    $region35: #{rnn_forward.1} parent=1 // pred_check_branch
      %74 = sbr.rel (0) target = $region37
    $region36: #{rnn_forward.1} parent=1 // pred_region
      _
    $region37: #{rnn_forward.1} parent=1 // pred_fallthru
      _
    // Predicated region
    $region38: #{rnn_forward.1} parent=1 // pred_check
      _
    $region39: #{rnn_forward.1} parent=1 // pred_check_branch
      %76 = sbr.rel (0) target = $region41
    $region40: #{rnn_forward.1} parent=1 // pred_region
      %78 = vsyncadd [#allocation10], 0
      %s79 = sshll.u32 %s9, 4
      %s80 = int_to_ptr.hbm [resolvable:$true] %s79
      %s81 = sshll.u32 [#allocation9], 4
      %s82 = int_to_ptr.vmem [resolvable:$true] %s81
      %87 = dma.hbm_to_vmem [thread:$0]  %s80, 256, %s82, [#allocation10], 64, 64, 4
    $region41: #{rnn_forward.1} parent=1 // pred_fallthru
      _
    // Predicated region
    $region42: #{rnn_forward.1} parent=1 // pred_check
      _
    $region43: #{rnn_forward.1} parent=1 // pred_check_branch
      %89 = sbr.rel (0) target = $region45
    $region44: #{rnn_forward.1} parent=1 // pred_region
      _
    $region45: #{rnn_forward.1} parent=1 // pred_fallthru
      _
    // Predicated region
    $region46: #{rnn_forward.1} parent=1 // pred_check
      _
    $region47: #{rnn_forward.1} parent=1 // pred_check_branch
      %91 = sbr.rel (0) target = $region49
    $region48: #{rnn_forward.1} parent=1 // pred_region
      %93 = dma.done [#allocation4], 64
    $region49: #{rnn_forward.1} parent=1 // pred_fallthru
      _
    // Predicated region
    $region50: #{rnn_forward.1} parent=1 // pred_check
      _
    $region51: #{rnn_forward.1} parent=1 // pred_check_branch
      %95 = sbr.rel (0) target = $region53
    $region52: #{rnn_forward.1} parent=1 // pred_region
      %97 = dma.done [#allocation7], 64
    $region53: #{rnn_forward.1} parent=1 // pred_fallthru
      _
    // Predicated region
    $region54: #{rnn_forward.1} parent=1 // pred_check
      _
    $region55: #{rnn_forward.1} parent=1 // pred_check_branch
      %99 = sbr.rel (0) target = $region57
    $region56: #{rnn_forward.1} parent=1 // pred_region
      %101 = dma.done [#allocation7], 256
    $region57: #{rnn_forward.1} parent=1 // pred_fallthru
      _
    // Predicated region
    $region58: #{rnn_forward.1} parent=1 // pred_check
      _
    $region59: #{rnn_forward.1} parent=1 // pred_check_branch
      %103 = sbr.rel (0) target = $region61
    $region60: #{rnn_forward.1} parent=1 // pred_region
      %105 = dma.done [#allocation10], 256
    $region61: #{rnn_forward.1} parent=1 // pred_fallthru
      _
    %v107 = vld [vmem:[%s0] sm:$0xf]
    %v108 = vld [vmem:[%s0 + $0x4] sm:$0xf]
    %v109 = vld [vmem:[%s3] sm:$0xf]
    %v110 = vld [vmem:[%s3 + $0x4] sm:$0xf]
    %v111 = vld [vmem:[%s4] sm:$0xf]
    %v112 = vld [vmem:[%s4 + $0x4] sm:$0xf]
    %v113 = vld [vmem:[%s4 + $0x8] sm:$0xf]
    %v114 = vld [vmem:[%s4 + $0xc] sm:$0xf]
    %v115 = vld [vmem:[%s5] sm:$0x1]
    %v117 = vperm.slane %v115, 0
    %v121 = vunpack.c.l.b16 %v107
    %v122 = vunpack.c.l.b16 %v108
    %v123 = vpack.c.b16 %v122, %v121
    %v126 = vunpack.c.l.b16 %v109
    %v127 = vunpack.c.l.b16 %v110
    %v128 = vpack.c.b16 %v127, %v126
    %vm130 = vcmask 130048
    %v132 = vsel %vm130, %v123, 0
    %134 = vmatpush.bf16.msra.mxu0 0
    %135 = vmatpush.bf16.msra.mxu0 0
    %136 = vmatpush.bf16.msra.mxu0 0
    %137 = vmatpush.bf16.msra.mxu0 0
    %138 = vmatpush.bf16.msra.mxu0 0
    %139 = vmatpush.bf16.msra.mxu0 0
    %140 = vmatpush.bf16.msra.mxu0 0
    %141 = vmatpush.bf16.msra.mxu0 %v128
    %142 = vmatmul.bf16.gmra.mxu0 %v132
    %v143 = vpop.f32.mrf.mxu0
    %v144 = vadd.f32 %v117, %v143
    %v145 = vpop.f32.mrf.mxu0
    %v146 = vadd.f32 %v117, %v145
    %147 = vdwg.mxu0
    %v148 = vld [vmem:[#allocation3] sm:$0x3]
    %v149 = vld [vmem:[#allocation6] sm:$0x3]
    %v150 = vpack.c.bf16 %v148, %v148
    %v155 = vunpack.c.l.b16 %v111
    %v156 = vunpack.c.l.b16 %v112
    %v157 = vunpack.c.l.b16 %v113
    %v158 = vunpack.c.l.b16 %v114
    %v159 = vpack.c.b16 %v156, %v155
    %v160 = vpack.c.b16 %v158, %v157
    %vm163 = vcmask 261120
    %v165 = vsel %vm163, %v150, 0
    %167 = vmatpush.bf16.msra.mxu0 0
    %168 = vmatpush.bf16.msra.mxu0 0
    %169 = vmatpush.bf16.msra.mxu0 0
    %170 = vmatpush.bf16.msra.mxu0 0
    %171 = vmatpush.bf16.msra.mxu0 0
    %172 = vmatpush.bf16.msra.mxu0 0
    %173 = vmatpush.bf16.msra.mxu0 %v160
    %174 = vmatpush.bf16.msra.mxu0 %v159
    %175 = vmatmul.bf16.gmra.mxu0 %v165
    %v176 = vpop.f32.mrf.mxu0
    %v177 = vadd.f32 0.0, %v176
    %v178 = vpop.f32.mrf.mxu0
    %179 = vdwg.mxu0
    %v180 = vadd.f32 %v144, %v177
    %v181 = vxor.u32 %v180, 2147483648
    %v182 = vmul.f32 %v181, 1.442695
    %v183 = vpow.pop %v182
    %v184 = vadd.f32 %v183, 1.0
    %v185 = vrcp.pop %v184
    %v186 = vmul.f32 %v184, %v185
    %v187 = vsub.f32 1.0, %v186
    %v188 = vmul.f32 %v185, %v187
    %v189 = vadd.f32 %v185, %v188
    %vm190 = vweird.f32 %v184
    %vm191 = vweird.f32 %v185
    %vm192 = vmor %vm190, %vm191
    %v193 = vsel %vm192, %v185, %v189
    %v194 = vand.u32 2147483647, %v184
    %vm195 = vcmp.eq.f32.partialorder %v194, 8.507059e+37
    %v196 = vand.u32 %v184, 2147483648
    %v197 = vor.u32 1.1754944e-38, %v196
    %v198 = vsel %vm195, %v197, %v193
    %v199 = vmul.f32 1.0, %v198
    %v200 = vtanh.pop %v180
    %202 = vrot.lane.b32.xlu0 %v149, 32
    %v203 = vpop.permute.xlu0 %202
    %v205 = vmul.f32 %v199, %v203
    %207 = vrot.lane.b32.xlu0 %v200, 64
    %v208 = vpop.permute.xlu0 %207
    %v210 = vmul.f32 %v199, %v208
    %212 = vrot.lane.b32.xlu0 %v210, 32
    %v213 = vpop.permute.xlu0 %212
    %v215 = vadd.f32 %v205, %v213
    %v216 = vtanh.pop %v215
    %218 = vrot.lane.b32.xlu0 %v216, 64
    %v219 = vpop.permute.xlu0 %218
    %v221 = vmul.f32 %v199, %v219
    %223 = vrot.lane.b32.xlu0 %v221, 32
    %v224 = vpop.permute.xlu0 %223
    %vm226 = vcmask 254976
    %227 = vst.msk [vmem:[#allocation2] sm:$0x3] %vm226, %v224
    %v228 = vpack.c.bf16 %v221, %v221
    %230 = vrot.lane.b32.xlu0 %v228, 32
    %v231 = vpop.permute.xlu0 %230
    %v233 = vsel %vm163, %v231, 0
    %235 = vmatpush.bf16.msra.mxu0 0
    %236 = vmatpush.bf16.msra.mxu0 0
    %237 = vmatpush.bf16.msra.mxu0 0
    %238 = vmatpush.bf16.msra.mxu0 0
    %239 = vmatpush.bf16.msra.mxu0 0
    %240 = vmatpush.bf16.msra.mxu0 0
    %241 = vmatpush.bf16.msra.mxu0 %v160
    %242 = vmatpush.bf16.msra.mxu0 %v159
    %243 = vmatmul.bf16.gmra.mxu0 %v233
    %v244 = vpop.f32.mrf.mxu0
    %v245 = vadd.f32 0.0, %v244
    %v246 = vpop.f32.mrf.mxu0
    %247 = vdwg.mxu0
    %v249 = vrot.slane %v245, 6
    %v251 = vadd.f32 %v144, %v249
    %v252 = vxor.u32 %v251, 2147483648
    %v253 = vmul.f32 %v252, 1.442695
    %v254 = vpow.pop %v253
    %v255 = vadd.f32 %v254, 1.0
    %v256 = vrcp.pop %v255
    %v257 = vmul.f32 %v255, %v256
    %v258 = vsub.f32 1.0, %v257
    %v259 = vmul.f32 %v256, %v258
    %v260 = vadd.f32 %v256, %v259
    %vm261 = vweird.f32 %v255
    %vm262 = vweird.f32 %v256
    %vm263 = vmor %vm261, %vm262
    %v264 = vsel %vm263, %v256, %v260
    %v265 = vand.u32 2147483647, %v255
    %vm266 = vcmp.eq.f32.partialorder %v265, 8.507059e+37
    %v267 = vand.u32 %v255, 2147483648
    %v268 = vor.u32 1.1754944e-38, %v267
    %v269 = vsel %vm266, %v268, %v264
    %v270 = vmul.f32 1.0, %v269
    %v271 = vtanh.pop %v251
    %v273 = vrot.slane %v215, 6
    %v275 = vmul.f32 %v270, %v273
    %277 = vrot.lane.b32.xlu0 %v271, 64
    %v278 = vpop.permute.xlu0 %277
    %v280 = vmul.f32 %v270, %v278
    %282 = vrot.lane.b32.xlu0 %v280, 32
    %v283 = vpop.permute.xlu0 %282
    %v285 = vadd.f32 %v275, %v283
    %v286 = vtanh.pop %v285
    %288 = vrot.lane.b32.xlu0 %v286, 64
    %v289 = vpop.permute.xlu0 %288
    %v291 = vmul.f32 %v270, %v289
    %293 = vrot.lane.b32.xlu0 %v291, 32
    %v294 = vpop.permute.xlu0 %293
    %vm296 = vcmask 257026
    %297 = vst.msk [vmem:[#allocation2] sm:$0xc] %vm296, %v294
    %v298 = vpack.c.bf16 %v291, %v291
    %v300 = vrot.slane %v298, 1
    %301 = vrot.lane.b32.xlu0 %v300, 32
    %v302 = vpop.permute.xlu0 %301
    %v304 = vsel %vm163, %v302, 0
    %306 = vmatpush.bf16.msra.mxu0 0
    %307 = vmatpush.bf16.msra.mxu0 0
    %308 = vmatpush.bf16.msra.mxu0 0
    %309 = vmatpush.bf16.msra.mxu0 0
    %310 = vmatpush.bf16.msra.mxu0 0
    %311 = vmatpush.bf16.msra.mxu0 0
    %312 = vmatpush.bf16.msra.mxu0 %v160
    %313 = vmatpush.bf16.msra.mxu0 %v159
    %314 = vmatmul.bf16.gmra.mxu0 %v304
    %v315 = vpop.f32.mrf.mxu0
    %v316 = vadd.f32 0.0, %v315
    %v317 = vpop.f32.mrf.mxu0
    %318 = vdwg.mxu0
    %v320 = vrot.slane %v316, 4
    %v322 = vadd.f32 %v144, %v320
    %v323 = vxor.u32 %v322, 2147483648
    %v324 = vmul.f32 %v323, 1.442695
    %v325 = vpow.pop %v324
    %v326 = vadd.f32 %v325, 1.0
    %v327 = vrcp.pop %v326
    %v328 = vmul.f32 %v326, %v327
    %v329 = vsub.f32 1.0, %v328
    %v330 = vmul.f32 %v327, %v329
    %v331 = vadd.f32 %v327, %v330
    %vm332 = vweird.f32 %v326
    %vm333 = vweird.f32 %v327
    %vm334 = vmor %vm332, %vm333
    %v335 = vsel %vm334, %v327, %v331
    %v336 = vand.u32 2147483647, %v326
    %vm337 = vcmp.eq.f32.partialorder %v336, 8.507059e+37
    %v338 = vand.u32 %v326, 2147483648
    %v339 = vor.u32 1.1754944e-38, %v338
    %v340 = vsel %vm337, %v339, %v335
    %v341 = vmul.f32 1.0, %v340
    %v342 = vtanh.pop %v322
    %v344 = vrot.slane %v285, 6
    %v346 = vmul.f32 %v341, %v344
    %348 = vrot.lane.b32.xlu0 %v342, 64
    %v349 = vpop.permute.xlu0 %348
    %v351 = vmul.f32 %v341, %v349
    %353 = vrot.lane.b32.xlu0 %v351, 32
    %v354 = vpop.permute.xlu0 %353
    %v356 = vadd.f32 %v346, %v354
    %v357 = vtanh.pop %v356
    %359 = vrot.lane.b32.xlu0 %v357, 64
    %v360 = vpop.permute.xlu0 %359
    %v362 = vmul.f32 %v341, %v360
    %364 = vrot.lane.b32.xlu0 %v362, 32
    %v365 = vpop.permute.xlu0 %364
    %vm367 = vcmask 259076
    %368 = vst.msk [vmem:[#allocation2] sm:$0x30] %vm367, %v365
    %v369 = vpack.c.bf16 %v362, %v362
    %v371 = vrot.slane %v369, 2
    %372 = vrot.lane.b32.xlu0 %v371, 32
    %v373 = vpop.permute.xlu0 %372
    %v375 = vsel %vm163, %v373, 0
    %377 = vmatpush.bf16.msra.mxu0 0
    %378 = vmatpush.bf16.msra.mxu0 0
    %379 = vmatpush.bf16.msra.mxu0 0
    %380 = vmatpush.bf16.msra.mxu0 0
    %381 = vmatpush.bf16.msra.mxu0 0
    %382 = vmatpush.bf16.msra.mxu0 0
    %383 = vmatpush.bf16.msra.mxu0 %v160
    %384 = vmatpush.bf16.msra.mxu0 %v159
    %385 = vmatmul.bf16.gmra.mxu0 %v375
    %v386 = vpop.f32.mrf.mxu0
    %v387 = vadd.f32 0.0, %v386
    %v388 = vpop.f32.mrf.mxu0
    %389 = vdwg.mxu0
    %v391 = vrot.slane %v387, 2
    %v393 = vadd.f32 %v144, %v391
    %v394 = vxor.u32 %v393, 2147483648
    %v395 = vmul.f32 %v394, 1.442695
    %v396 = vpow.pop %v395
    %v397 = vadd.f32 %v396, 1.0
    %v398 = vrcp.pop %v397
    %v399 = vmul.f32 %v397, %v398
    %v400 = vsub.f32 1.0, %v399
    %v401 = vmul.f32 %v398, %v400
    %v402 = vadd.f32 %v398, %v401
    %vm403 = vweird.f32 %v397
    %vm404 = vweird.f32 %v398
    %vm405 = vmor %vm403, %vm404
    %v406 = vsel %vm405, %v398, %v402
    %v407 = vand.u32 2147483647, %v397
    %vm408 = vcmp.eq.f32.partialorder %v407, 8.507059e+37
    %v409 = vand.u32 %v397, 2147483648
    %v410 = vor.u32 1.1754944e-38, %v409
    %v411 = vsel %vm408, %v410, %v406
    %v412 = vmul.f32 1.0, %v411
    %v413 = vtanh.pop %v393
    %v415 = vrot.slane %v356, 6
    %v417 = vmul.f32 %v412, %v415
    %419 = vrot.lane.b32.xlu0 %v413, 64
    %v420 = vpop.permute.xlu0 %419
    %v422 = vmul.f32 %v412, %v420
    %424 = vrot.lane.b32.xlu0 %v422, 32
    %v425 = vpop.permute.xlu0 %424
    %v427 = vadd.f32 %v417, %v425
    %v428 = vtanh.pop %v427
    %430 = vrot.lane.b32.xlu0 %v428, 64
    %v431 = vpop.permute.xlu0 %430
    %v433 = vmul.f32 %v412, %v431
    %435 = vrot.lane.b32.xlu0 %v433, 32
    %v436 = vpop.permute.xlu0 %435
    %vm438 = vcmask 261126
    %439 = vst.msk [vmem:[#allocation2] sm:$0xc0] %vm438, %v436
    %v440 = vpack.c.bf16 %v433, %v433
    %v442 = vrot.slane %v440, 3
    %443 = vrot.lane.b32.xlu0 %v442, 32
    %v444 = vpop.permute.xlu0 %443
    %v446 = vsel %vm163, %v444, 0
    %448 = vmatpush.bf16.msra.mxu0 0
    %449 = vmatpush.bf16.msra.mxu0 0
    %450 = vmatpush.bf16.msra.mxu0 0
    %451 = vmatpush.bf16.msra.mxu0 0
    %452 = vmatpush.bf16.msra.mxu0 0
    %453 = vmatpush.bf16.msra.mxu0 0
    %454 = vmatpush.bf16.msra.mxu0 %v160
    %455 = vmatpush.bf16.msra.mxu0 %v159
    %456 = vmatmul.bf16.gmra.mxu0 %v446
    %v457 = vpop.f32.mrf.mxu0
    %v458 = vadd.f32 0.0, %v457
    %v459 = vpop.f32.mrf.mxu0
    %460 = vdwg.mxu0
    %v461 = vadd.f32 %v146, %v458
    %v462 = vxor.u32 %v461, 2147483648
    %v463 = vmul.f32 %v462, 1.442695
    %v464 = vpow.pop %v463
    %v465 = vadd.f32 %v464, 1.0
    %v466 = vrcp.pop %v465
    %v467 = vmul.f32 %v465, %v466
    %v468 = vsub.f32 1.0, %v467
    %v469 = vmul.f32 %v466, %v468
    %v470 = vadd.f32 %v466, %v469
    %vm471 = vweird.f32 %v465
    %vm472 = vweird.f32 %v466
    %vm473 = vmor %vm471, %vm472
    %v474 = vsel %vm473, %v466, %v470
    %v475 = vand.u32 2147483647, %v465
    %vm476 = vcmp.eq.f32.partialorder %v475, 8.507059e+37
    %v477 = vand.u32 %v465, 2147483648
    %v478 = vor.u32 1.1754944e-38, %v477
    %v479 = vsel %vm476, %v478, %v474
    %v480 = vmul.f32 1.0, %v479
    %v481 = vtanh.pop %v461
    %v483 = vrot.slane %v427, 6
    %v485 = vmul.f32 %v480, %v483
    %487 = vrot.lane.b32.xlu0 %v481, 64
    %v488 = vpop.permute.xlu0 %487
    %v490 = vmul.f32 %v480, %v488
    %492 = vrot.lane.b32.xlu0 %v490, 32
    %v493 = vpop.permute.xlu0 %492
    %v495 = vadd.f32 %v485, %v493
    %v496 = vtanh.pop %v495
    %498 = vrot.lane.b32.xlu0 %v496, 64
    %v499 = vpop.permute.xlu0 %498
    %v501 = vmul.f32 %v480, %v499
    %503 = vrot.lane.b32.xlu0 %v501, 32
    %v504 = vpop.permute.xlu0 %503
    %506 = vst.msk [vmem:[#allocation2 + $0x8] sm:$0x3] %vm226, %v504
    %v507 = vpack.c.bf16 %v501, %v501
    %509 = vrot.lane.b32.xlu0 %v507, 32
    %v510 = vpop.permute.xlu0 %509
    %v512 = vsel %vm163, %v510, 0
    %514 = vmatpush.bf16.msra.mxu0 0
    %515 = vmatpush.bf16.msra.mxu0 0
    %516 = vmatpush.bf16.msra.mxu0 0
    %517 = vmatpush.bf16.msra.mxu0 0
    %518 = vmatpush.bf16.msra.mxu0 0
    %519 = vmatpush.bf16.msra.mxu0 0
    %520 = vmatpush.bf16.msra.mxu0 %v160
    %521 = vmatpush.bf16.msra.mxu0 %v159
    %522 = vmatmul.bf16.gmra.mxu0 %v512
    %v523 = vpop.f32.mrf.mxu0
    %v524 = vadd.f32 0.0, %v523
    %v525 = vpop.f32.mrf.mxu0
    %526 = vdwg.mxu0
    %v528 = vrot.slane %v524, 6
    %v530 = vadd.f32 %v146, %v528
    %v531 = vxor.u32 %v530, 2147483648
    %v532 = vmul.f32 %v531, 1.442695
    %v533 = vpow.pop %v532
    %v534 = vadd.f32 %v533, 1.0
    %v535 = vrcp.pop %v534
    %v536 = vmul.f32 %v534, %v535
    %v537 = vsub.f32 1.0, %v536
    %v538 = vmul.f32 %v535, %v537
    %v539 = vadd.f32 %v535, %v538
    %vm540 = vweird.f32 %v534
    %vm541 = vweird.f32 %v535
    %vm542 = vmor %vm540, %vm541
    %v543 = vsel %vm542, %v535, %v539
    %v544 = vand.u32 2147483647, %v534
    %vm545 = vcmp.eq.f32.partialorder %v544, 8.507059e+37
    %v546 = vand.u32 %v534, 2147483648
    %v547 = vor.u32 1.1754944e-38, %v546
    %v548 = vsel %vm545, %v547, %v543
    %v549 = vmul.f32 1.0, %v548
    %v550 = vtanh.pop %v530
    %v552 = vrot.slane %v495, 6
    %v554 = vmul.f32 %v549, %v552
    %556 = vrot.lane.b32.xlu0 %v550, 64
    %v557 = vpop.permute.xlu0 %556
    %v559 = vmul.f32 %v549, %v557
    %561 = vrot.lane.b32.xlu0 %v559, 32
    %v562 = vpop.permute.xlu0 %561
    %v564 = vadd.f32 %v554, %v562
    %v565 = vtanh.pop %v564
    %567 = vrot.lane.b32.xlu0 %v565, 64
    %v568 = vpop.permute.xlu0 %567
    %v570 = vmul.f32 %v549, %v568
    %572 = vrot.lane.b32.xlu0 %v570, 32
    %v573 = vpop.permute.xlu0 %572
    %575 = vst.msk [vmem:[#allocation2 + $0x8] sm:$0xc] %vm296, %v573
    %v576 = vpack.c.bf16 %v570, %v570
    %v578 = vrot.slane %v576, 1
    %579 = vrot.lane.b32.xlu0 %v578, 32
    %v580 = vpop.permute.xlu0 %579
    %v582 = vsel %vm163, %v580, 0
    %584 = vmatpush.bf16.msra.mxu0 0
    %585 = vmatpush.bf16.msra.mxu0 0
    %586 = vmatpush.bf16.msra.mxu0 0
    %587 = vmatpush.bf16.msra.mxu0 0
    %588 = vmatpush.bf16.msra.mxu0 0
    %589 = vmatpush.bf16.msra.mxu0 0
    %590 = vmatpush.bf16.msra.mxu0 %v160
    %591 = vmatpush.bf16.msra.mxu0 %v159
    %592 = vmatmul.bf16.gmra.mxu0 %v582
    %v593 = vpop.f32.mrf.mxu0
    %v594 = vadd.f32 0.0, %v593
    %v595 = vpop.f32.mrf.mxu0
    %596 = vdwg.mxu0
    %v598 = vrot.slane %v594, 4
    %v600 = vadd.f32 %v146, %v598
    %v601 = vxor.u32 %v600, 2147483648
    %v602 = vmul.f32 %v601, 1.442695
    %v603 = vpow.pop %v602
    %v604 = vadd.f32 %v603, 1.0
    %v605 = vrcp.pop %v604
    %v606 = vmul.f32 %v604, %v605
    %v607 = vsub.f32 1.0, %v606
    %v608 = vmul.f32 %v605, %v607
    %v609 = vadd.f32 %v605, %v608
    %vm610 = vweird.f32 %v604
    %vm611 = vweird.f32 %v605
    %vm612 = vmor %vm610, %vm611
    %v613 = vsel %vm612, %v605, %v609
    %v614 = vand.u32 2147483647, %v604
    %vm615 = vcmp.eq.f32.partialorder %v614, 8.507059e+37
    %v616 = vand.u32 %v604, 2147483648
    %v617 = vor.u32 1.1754944e-38, %v616
    %v618 = vsel %vm615, %v617, %v613
    %v619 = vmul.f32 1.0, %v618
    %v620 = vtanh.pop %v600
    %v622 = vrot.slane %v564, 6
    %v624 = vmul.f32 %v619, %v622
    %626 = vrot.lane.b32.xlu0 %v620, 64
    %v627 = vpop.permute.xlu0 %626
    %v629 = vmul.f32 %v619, %v627
    %631 = vrot.lane.b32.xlu0 %v629, 32
    %v632 = vpop.permute.xlu0 %631
    %v634 = vadd.f32 %v624, %v632
    %v635 = vtanh.pop %v634
    %637 = vrot.lane.b32.xlu0 %v635, 64
    %v638 = vpop.permute.xlu0 %637
    %v640 = vmul.f32 %v619, %v638
    %642 = vrot.lane.b32.xlu0 %v640, 32
    %v643 = vpop.permute.xlu0 %642
    %645 = vst.msk [vmem:[#allocation2 + $0x8] sm:$0x30] %vm367, %v643
    %v646 = vpack.c.bf16 %v640, %v640
    %v648 = vrot.slane %v646, 2
    %649 = vrot.lane.b32.xlu0 %v648, 32
    %v650 = vpop.permute.xlu0 %649
    %v652 = vsel %vm163, %v650, 0
    %654 = vmatpush.bf16.msra.mxu0 0
    %655 = vmatpush.bf16.msra.mxu0 0
    %656 = vmatpush.bf16.msra.mxu0 0
    %657 = vmatpush.bf16.msra.mxu0 0
    %658 = vmatpush.bf16.msra.mxu0 0
    %659 = vmatpush.bf16.msra.mxu0 0
    %660 = vmatpush.bf16.msra.mxu0 %v160
    %661 = vmatpush.bf16.msra.mxu0 %v159
    %662 = vmatmul.bf16.gmra.mxu0 %v652
    %v663 = vpop.f32.mrf.mxu0
    %v664 = vadd.f32 0.0, %v663
    %v665 = vpop.f32.mrf.mxu0
    %666 = vdwg.mxu0
    %v668 = vrot.slane %v664, 2
    %v670 = vadd.f32 %v146, %v668
    %v671 = vxor.u32 %v670, 2147483648
    %v672 = vmul.f32 %v671, 1.442695
    %v673 = vpow.pop %v672
    %v674 = vadd.f32 %v673, 1.0
    %v675 = vrcp.pop %v674
    %v676 = vmul.f32 %v674, %v675
    %v677 = vsub.f32 1.0, %v676
    %v678 = vmul.f32 %v675, %v677
    %v679 = vadd.f32 %v675, %v678
    %vm680 = vweird.f32 %v674
    %vm681 = vweird.f32 %v675
    %vm682 = vmor %vm680, %vm681
    %v683 = vsel %vm682, %v675, %v679
    %v684 = vand.u32 2147483647, %v674
    %vm685 = vcmp.eq.f32.partialorder %v684, 8.507059e+37
    %v686 = vand.u32 %v674, 2147483648
    %v687 = vor.u32 1.1754944e-38, %v686
    %v688 = vsel %vm685, %v687, %v683
    %v689 = vmul.f32 1.0, %v688
    %v690 = vtanh.pop %v670
    %v692 = vrot.slane %v634, 6
    %v694 = vmul.f32 %v689, %v692
    %696 = vrot.lane.b32.xlu0 %v690, 64
    %v697 = vpop.permute.xlu0 %696
    %v699 = vmul.f32 %v689, %v697
    %701 = vrot.lane.b32.xlu0 %v699, 32
    %v702 = vpop.permute.xlu0 %701
    %v704 = vadd.f32 %v694, %v702
    %v705 = vtanh.pop %v704
    %707 = vrot.lane.b32.xlu0 %v705, 64
    %v708 = vpop.permute.xlu0 %707
    %v710 = vmul.f32 %v689, %v708
    %712 = vrot.lane.b32.xlu0 %v710, 32
    %v713 = vpop.permute.xlu0 %712
    %715 = vst.msk [vmem:[#allocation2 + $0x8] sm:$0xc0] %vm438, %v713
    %716 = vst.msk [vmem:[#allocation11 - $0x6] sm:$0xc0] %vm438, %v713
    %718 = vrot.lane.b32.xlu0 %v704, 96
    %v719 = vpop.permute.xlu0 %718
    %721 = vst.msk [vmem:[#allocation12 - $0x6] sm:$0xc0] %vm438, %v719
    %v722 = vld [vmem:[#allocation2] sm:$0xff]
    %v723 = vld [vmem:[#allocation2 + $0x8] sm:$0xff]
    %v724 = vpack.c.bf16 %v723, %v722
    %v725 = vld [vmem:[%s6] sm:$0xf]
    %v726 = vld [vmem:[%s6 + $0x4] sm:$0xf]
    %v727 = vld [vmem:[%s6 + $0x8] sm:$0xf]
    %v728 = vld [vmem:[%s6 + $0xc] sm:$0xf]
    %v729 = vld [vmem:[#allocation8] sm:$0xf]
    %v730 = vld [vmem:[#allocation8 + $0x4] sm:$0xf]
    %v731 = vld [vmem:[#allocation8 + $0x8] sm:$0xf]
    %v732 = vld [vmem:[#allocation8 + $0xc] sm:$0xf]
    %v733 = vld [vmem:[%s8] sm:$0x1]
    %v735 = vperm.slane %v733, 0
    %v741 = vunpack.c.l.b16 %v725
    %v742 = vunpack.c.l.b16 %v726
    %v743 = vunpack.c.l.b16 %v727
    %v744 = vunpack.c.l.b16 %v728
    %v745 = vpack.c.b16 %v742, %v741
    %v746 = vpack.c.b16 %v744, %v743
    %v750 = vsel %vm163, %v724, 0
    %752 = vmatpush.bf16.msra.mxu0 0
    %753 = vmatpush.bf16.msra.mxu0 0
    %754 = vmatpush.bf16.msra.mxu0 0
    %755 = vmatpush.bf16.msra.mxu0 0
    %756 = vmatpush.bf16.msra.mxu0 0
    %757 = vmatpush.bf16.msra.mxu0 0
    %758 = vmatpush.bf16.msra.mxu0 %v746
    %759 = vmatpush.bf16.msra.mxu0 %v745
    %760 = vmatmul.bf16.gmra.mxu0 %v750
    %v761 = vpop.f32.mrf.mxu0
    %v762 = vadd.f32 %v735, %v761
    %v763 = vpop.f32.mrf.mxu0
    %v764 = vadd.f32 %v735, %v763
    %765 = vdwg.mxu0
    %s766 = scalar_lea.vmem [#allocation3], 2
    %v767 = vld [vmem:[%s766] sm:$0x3]
    %s768 = scalar_lea.vmem [#allocation6], 2
    %v769 = vld [vmem:[%s768] sm:$0x3]
    %v770 = vpack.c.bf16 %v767, %v767
    %v775 = vunpack.c.l.b16 %v729
    %v776 = vunpack.c.l.b16 %v730
    %v777 = vunpack.c.l.b16 %v731
    %v778 = vunpack.c.l.b16 %v732
    %v779 = vpack.c.b16 %v776, %v775
    %v780 = vpack.c.b16 %v778, %v777
    %v784 = vsel %vm163, %v770, 0
    %786 = vmatpush.bf16.msra.mxu0 0
    %787 = vmatpush.bf16.msra.mxu0 0
    %788 = vmatpush.bf16.msra.mxu0 0
    %789 = vmatpush.bf16.msra.mxu0 0
    %790 = vmatpush.bf16.msra.mxu0 0
    %791 = vmatpush.bf16.msra.mxu0 0
    %792 = vmatpush.bf16.msra.mxu0 %v780
    %793 = vmatpush.bf16.msra.mxu0 %v779
    %794 = vmatmul.bf16.gmra.mxu0 %v784
    %v795 = vpop.f32.mrf.mxu0
    %v796 = vadd.f32 0.0, %v795
    %v797 = vpop.f32.mrf.mxu0
    %798 = vdwg.mxu0
    %v799 = vadd.f32 %v762, %v796
    %v800 = vxor.u32 %v799, 2147483648
    %v801 = vmul.f32 %v800, 1.442695
    %v802 = vpow.pop %v801
    %v803 = vadd.f32 %v802, 1.0
    %v804 = vrcp.pop %v803
    %v805 = vmul.f32 %v803, %v804
    %v806 = vsub.f32 1.0, %v805
    %v807 = vmul.f32 %v804, %v806
    %v808 = vadd.f32 %v804, %v807
    %vm809 = vweird.f32 %v803
    %vm810 = vweird.f32 %v804
    %vm811 = vmor %vm809, %vm810
    %v812 = vsel %vm811, %v804, %v808
    %v813 = vand.u32 2147483647, %v803
    %vm814 = vcmp.eq.f32.partialorder %v813, 8.507059e+37
    %v815 = vand.u32 %v803, 2147483648
    %v816 = vor.u32 1.1754944e-38, %v815
    %v817 = vsel %vm814, %v816, %v812
    %v818 = vmul.f32 1.0, %v817
    %v819 = vtanh.pop %v799
    %821 = vrot.lane.b32.xlu0 %v769, 32
    %v822 = vpop.permute.xlu0 %821
    %v824 = vmul.f32 %v818, %v822
    %826 = vrot.lane.b32.xlu0 %v819, 64
    %v827 = vpop.permute.xlu0 %826
    %v829 = vmul.f32 %v818, %v827
    %831 = vrot.lane.b32.xlu0 %v829, 32
    %v832 = vpop.permute.xlu0 %831
    %v834 = vadd.f32 %v824, %v832
    %v835 = vtanh.pop %v834
    %837 = vrot.lane.b32.xlu0 %v835, 64
    %v838 = vpop.permute.xlu0 %837
    %v840 = vmul.f32 %v818, %v838
    %842 = vrot.lane.b32.xlu0 %v840, 32
    %v843 = vpop.permute.xlu0 %842
    %845 = vst.msk [vmem:[#allocation2] sm:$0x3] %vm226, %v843
    %v846 = vpack.c.bf16 %v840, %v840
    %848 = vrot.lane.b32.xlu0 %v846, 32
    %v849 = vpop.permute.xlu0 %848
    %v851 = vsel %vm163, %v849, 0
    %853 = vmatpush.bf16.msra.mxu0 0
    %854 = vmatpush.bf16.msra.mxu0 0
    %855 = vmatpush.bf16.msra.mxu0 0
    %856 = vmatpush.bf16.msra.mxu0 0
    %857 = vmatpush.bf16.msra.mxu0 0
    %858 = vmatpush.bf16.msra.mxu0 0
    %859 = vmatpush.bf16.msra.mxu0 %v780
    %860 = vmatpush.bf16.msra.mxu0 %v779
    %861 = vmatmul.bf16.gmra.mxu0 %v851
    %v862 = vpop.f32.mrf.mxu0
    %v863 = vadd.f32 0.0, %v862
    %v864 = vpop.f32.mrf.mxu0
    %865 = vdwg.mxu0
    %v867 = vrot.slane %v863, 6
    %v869 = vadd.f32 %v762, %v867
    %v870 = vxor.u32 %v869, 2147483648
    %v871 = vmul.f32 %v870, 1.442695
    %v872 = vpow.pop %v871
    %v873 = vadd.f32 %v872, 1.0
    %v874 = vrcp.pop %v873
    %v875 = vmul.f32 %v873, %v874
    %v876 = vsub.f32 1.0, %v875
    %v877 = vmul.f32 %v874, %v876
    %v878 = vadd.f32 %v874, %v877
    %vm879 = vweird.f32 %v873
    %vm880 = vweird.f32 %v874
    %vm881 = vmor %vm879, %vm880
    %v882 = vsel %vm881, %v874, %v878
    %v883 = vand.u32 2147483647, %v873
    %vm884 = vcmp.eq.f32.partialorder %v883, 8.507059e+37
    %v885 = vand.u32 %v873, 2147483648
    %v886 = vor.u32 1.1754944e-38, %v885
    %v887 = vsel %vm884, %v886, %v882
    %v888 = vmul.f32 1.0, %v887
    %v889 = vtanh.pop %v869
    %v891 = vrot.slane %v834, 6
    %v893 = vmul.f32 %v888, %v891
    %895 = vrot.lane.b32.xlu0 %v889, 64
    %v896 = vpop.permute.xlu0 %895
    %v898 = vmul.f32 %v888, %v896
    %900 = vrot.lane.b32.xlu0 %v898, 32
    %v901 = vpop.permute.xlu0 %900
    %v903 = vadd.f32 %v893, %v901
    %v904 = vtanh.pop %v903
    %906 = vrot.lane.b32.xlu0 %v904, 64
    %v907 = vpop.permute.xlu0 %906
    %v909 = vmul.f32 %v888, %v907
    %911 = vrot.lane.b32.xlu0 %v909, 32
    %v912 = vpop.permute.xlu0 %911
    %914 = vst.msk [vmem:[#allocation2] sm:$0xc] %vm296, %v912
    %v915 = vpack.c.bf16 %v909, %v909
    %v917 = vrot.slane %v915, 1
    %918 = vrot.lane.b32.xlu0 %v917, 32
    %v919 = vpop.permute.xlu0 %918
    %v921 = vsel %vm163, %v919, 0
    %923 = vmatpush.bf16.msra.mxu0 0
    %924 = vmatpush.bf16.msra.mxu0 0
    %925 = vmatpush.bf16.msra.mxu0 0
    %926 = vmatpush.bf16.msra.mxu0 0
    %927 = vmatpush.bf16.msra.mxu0 0
    %928 = vmatpush.bf16.msra.mxu0 0
    %929 = vmatpush.bf16.msra.mxu0 %v780
    %930 = vmatpush.bf16.msra.mxu0 %v779
    %931 = vmatmul.bf16.gmra.mxu0 %v921
    %v932 = vpop.f32.mrf.mxu0
    %v933 = vadd.f32 0.0, %v932
    %v934 = vpop.f32.mrf.mxu0
    %935 = vdwg.mxu0
    %v937 = vrot.slane %v933, 4
    %v939 = vadd.f32 %v762, %v937
    %v940 = vxor.u32 %v939, 2147483648
    %v941 = vmul.f32 %v940, 1.442695
    %v942 = vpow.pop %v941
    %v943 = vadd.f32 %v942, 1.0
    %v944 = vrcp.pop %v943
    %v945 = vmul.f32 %v943, %v944
    %v946 = vsub.f32 1.0, %v945
    %v947 = vmul.f32 %v944, %v946
    %v948 = vadd.f32 %v944, %v947
    %vm949 = vweird.f32 %v943
    %vm950 = vweird.f32 %v944
    %vm951 = vmor %vm949, %vm950
    %v952 = vsel %vm951, %v944, %v948
    %v953 = vand.u32 2147483647, %v943
    %vm954 = vcmp.eq.f32.partialorder %v953, 8.507059e+37
    %v955 = vand.u32 %v943, 2147483648
    %v956 = vor.u32 1.1754944e-38, %v955
    %v957 = vsel %vm954, %v956, %v952
    %v958 = vmul.f32 1.0, %v957
    %v959 = vtanh.pop %v939
    %v961 = vrot.slane %v903, 6
    %v963 = vmul.f32 %v958, %v961
    %965 = vrot.lane.b32.xlu0 %v959, 64
    %v966 = vpop.permute.xlu0 %965
    %v968 = vmul.f32 %v958, %v966
    %970 = vrot.lane.b32.xlu0 %v968, 32
    %v971 = vpop.permute.xlu0 %970
    %v973 = vadd.f32 %v963, %v971
    %v974 = vtanh.pop %v973
    %976 = vrot.lane.b32.xlu0 %v974, 64
    %v977 = vpop.permute.xlu0 %976
    %v979 = vmul.f32 %v958, %v977
    %981 = vrot.lane.b32.xlu0 %v979, 32
    %v982 = vpop.permute.xlu0 %981
    %984 = vst.msk [vmem:[#allocation2] sm:$0x30] %vm367, %v982
    %v985 = vpack.c.bf16 %v979, %v979
    %v987 = vrot.slane %v985, 2
    %988 = vrot.lane.b32.xlu0 %v987, 32
    %v989 = vpop.permute.xlu0 %988
    %v991 = vsel %vm163, %v989, 0
    %993 = vmatpush.bf16.msra.mxu0 0
    %994 = vmatpush.bf16.msra.mxu0 0
    %995 = vmatpush.bf16.msra.mxu0 0
    %996 = vmatpush.bf16.msra.mxu0 0
    %997 = vmatpush.bf16.msra.mxu0 0
    %998 = vmatpush.bf16.msra.mxu0 0
    %999 = vmatpush.bf16.msra.mxu0 %v780
    %1000 = vmatpush.bf16.msra.mxu0 %v779
    %1001 = vmatmul.bf16.gmra.mxu0 %v991
    %v1002 = vpop.f32.mrf.mxu0
    %v1003 = vadd.f32 0.0, %v1002
    %v1004 = vpop.f32.mrf.mxu0
    %1005 = vdwg.mxu0
    %v1007 = vrot.slane %v1003, 2
    %v1009 = vadd.f32 %v762, %v1007
    %v1010 = vxor.u32 %v1009, 2147483648
    %v1011 = vmul.f32 %v1010, 1.442695
    %v1012 = vpow.pop %v1011
    %v1013 = vadd.f32 %v1012, 1.0
    %v1014 = vrcp.pop %v1013
    %v1015 = vmul.f32 %v1013, %v1014
    %v1016 = vsub.f32 1.0, %v1015
    %v1017 = vmul.f32 %v1014, %v1016
    %v1018 = vadd.f32 %v1014, %v1017
    %vm1019 = vweird.f32 %v1013
    %vm1020 = vweird.f32 %v1014
    %vm1021 = vmor %vm1019, %vm1020
    %v1022 = vsel %vm1021, %v1014, %v1018
    %v1023 = vand.u32 2147483647, %v1013
    %vm1024 = vcmp.eq.f32.partialorder %v1023, 8.507059e+37
    %v1025 = vand.u32 %v1013, 2147483648
    %v1026 = vor.u32 1.1754944e-38, %v1025
    %v1027 = vsel %vm1024, %v1026, %v1022
    %v1028 = vmul.f32 1.0, %v1027
    %v1029 = vtanh.pop %v1009
    %v1031 = vrot.slane %v973, 6
    %v1033 = vmul.f32 %v1028, %v1031
    %1035 = vrot.lane.b32.xlu0 %v1029, 64
    %v1036 = vpop.permute.xlu0 %1035
    %v1038 = vmul.f32 %v1028, %v1036
    %1040 = vrot.lane.b32.xlu0 %v1038, 32
    %v1041 = vpop.permute.xlu0 %1040
    %v1043 = vadd.f32 %v1033, %v1041
    %v1044 = vtanh.pop %v1043
    %1046 = vrot.lane.b32.xlu0 %v1044, 64
    %v1047 = vpop.permute.xlu0 %1046
    %v1049 = vmul.f32 %v1028, %v1047
    %1051 = vrot.lane.b32.xlu0 %v1049, 32
    %v1052 = vpop.permute.xlu0 %1051
    %1054 = vst.msk [vmem:[#allocation2] sm:$0xc0] %vm438, %v1052
    %v1055 = vpack.c.bf16 %v1049, %v1049
    %v1057 = vrot.slane %v1055, 3
    %1058 = vrot.lane.b32.xlu0 %v1057, 32
    %v1059 = vpop.permute.xlu0 %1058
    %v1061 = vsel %vm163, %v1059, 0
    %1063 = vmatpush.bf16.msra.mxu0 0
    %1064 = vmatpush.bf16.msra.mxu0 0
    %1065 = vmatpush.bf16.msra.mxu0 0
    %1066 = vmatpush.bf16.msra.mxu0 0
    %1067 = vmatpush.bf16.msra.mxu0 0
    %1068 = vmatpush.bf16.msra.mxu0 0
    %1069 = vmatpush.bf16.msra.mxu0 %v780
    %1070 = vmatpush.bf16.msra.mxu0 %v779
    %1071 = vmatmul.bf16.gmra.mxu0 %v1061
    %v1072 = vpop.f32.mrf.mxu0
    %v1073 = vadd.f32 0.0, %v1072
    %v1074 = vpop.f32.mrf.mxu0
    %1075 = vdwg.mxu0
    %v1076 = vadd.f32 %v764, %v1073
    %v1077 = vxor.u32 %v1076, 2147483648
    %v1078 = vmul.f32 %v1077, 1.442695
    %v1079 = vpow.pop %v1078
    %v1080 = vadd.f32 %v1079, 1.0
    %v1081 = vrcp.pop %v1080
    %v1082 = vmul.f32 %v1080, %v1081
    %v1083 = vsub.f32 1.0, %v1082
    %v1084 = vmul.f32 %v1081, %v1083
    %v1085 = vadd.f32 %v1081, %v1084
    %vm1086 = vweird.f32 %v1080
    %vm1087 = vweird.f32 %v1081
    %vm1088 = vmor %vm1086, %vm1087
    %v1089 = vsel %vm1088, %v1081, %v1085
    %v1090 = vand.u32 2147483647, %v1080
    %vm1091 = vcmp.eq.f32.partialorder %v1090, 8.507059e+37
    %v1092 = vand.u32 %v1080, 2147483648
    %v1093 = vor.u32 1.1754944e-38, %v1092
    %v1094 = vsel %vm1091, %v1093, %v1089
    %v1095 = vmul.f32 1.0, %v1094
    %v1096 = vtanh.pop %v1076
    %v1098 = vrot.slane %v1043, 6
    %v1100 = vmul.f32 %v1095, %v1098
    %1102 = vrot.lane.b32.xlu0 %v1096, 64
    %v1103 = vpop.permute.xlu0 %1102
    %v1105 = vmul.f32 %v1095, %v1103
    %1107 = vrot.lane.b32.xlu0 %v1105, 32
    %v1108 = vpop.permute.xlu0 %1107
    %v1110 = vadd.f32 %v1100, %v1108
    %v1111 = vtanh.pop %v1110
    %1113 = vrot.lane.b32.xlu0 %v1111, 64
    %v1114 = vpop.permute.xlu0 %1113
    %v1116 = vmul.f32 %v1095, %v1114
    %1118 = vrot.lane.b32.xlu0 %v1116, 32
    %v1119 = vpop.permute.xlu0 %1118
    %1121 = vst.msk [vmem:[#allocation2 + $0x8] sm:$0x3] %vm226, %v1119
    %v1122 = vpack.c.bf16 %v1116, %v1116
    %1124 = vrot.lane.b32.xlu0 %v1122, 32
    %v1125 = vpop.permute.xlu0 %1124
    %v1127 = vsel %vm163, %v1125, 0
    %1129 = vmatpush.bf16.msra.mxu0 0
    %1130 = vmatpush.bf16.msra.mxu0 0
    %1131 = vmatpush.bf16.msra.mxu0 0
    %1132 = vmatpush.bf16.msra.mxu0 0
    %1133 = vmatpush.bf16.msra.mxu0 0
    %1134 = vmatpush.bf16.msra.mxu0 0
    %1135 = vmatpush.bf16.msra.mxu0 %v780
    %1136 = vmatpush.bf16.msra.mxu0 %v779
    %1137 = vmatmul.bf16.gmra.mxu0 %v1127
    %v1138 = vpop.f32.mrf.mxu0
    %v1139 = vadd.f32 0.0, %v1138
    %v1140 = vpop.f32.mrf.mxu0
    %1141 = vdwg.mxu0
    %v1143 = vrot.slane %v1139, 6
    %v1145 = vadd.f32 %v764, %v1143
    %v1146 = vxor.u32 %v1145, 2147483648
    %v1147 = vmul.f32 %v1146, 1.442695
    %v1148 = vpow.pop %v1147
    %v1149 = vadd.f32 %v1148, 1.0
    %v1150 = vrcp.pop %v1149
    %v1151 = vmul.f32 %v1149, %v1150
    %v1152 = vsub.f32 1.0, %v1151
    %v1153 = vmul.f32 %v1150, %v1152
    %v1154 = vadd.f32 %v1150, %v1153
    %vm1155 = vweird.f32 %v1149
    %vm1156 = vweird.f32 %v1150
    %vm1157 = vmor %vm1155, %vm1156
    %v1158 = vsel %vm1157, %v1150, %v1154
    %v1159 = vand.u32 2147483647, %v1149
    %vm1160 = vcmp.eq.f32.partialorder %v1159, 8.507059e+37
    %v1161 = vand.u32 %v1149, 2147483648
    %v1162 = vor.u32 1.1754944e-38, %v1161
    %v1163 = vsel %vm1160, %v1162, %v1158
    %v1164 = vmul.f32 1.0, %v1163
    %v1165 = vtanh.pop %v1145
    %v1167 = vrot.slane %v1110, 6
    %v1169 = vmul.f32 %v1164, %v1167
    %1171 = vrot.lane.b32.xlu0 %v1165, 64
    %v1172 = vpop.permute.xlu0 %1171
    %v1174 = vmul.f32 %v1164, %v1172
    %1176 = vrot.lane.b32.xlu0 %v1174, 32
    %v1177 = vpop.permute.xlu0 %1176
    %v1179 = vadd.f32 %v1169, %v1177
    %v1180 = vtanh.pop %v1179
    %1182 = vrot.lane.b32.xlu0 %v1180, 64
    %v1183 = vpop.permute.xlu0 %1182
    %v1185 = vmul.f32 %v1164, %v1183
    %1187 = vrot.lane.b32.xlu0 %v1185, 32
    %v1188 = vpop.permute.xlu0 %1187
    %1190 = vst.msk [vmem:[#allocation2 + $0x8] sm:$0xc] %vm296, %v1188
    %v1191 = vpack.c.bf16 %v1185, %v1185
    %v1193 = vrot.slane %v1191, 1
    %1194 = vrot.lane.b32.xlu0 %v1193, 32
    %v1195 = vpop.permute.xlu0 %1194
    %v1197 = vsel %vm163, %v1195, 0
    %1199 = vmatpush.bf16.msra.mxu0 0
    %1200 = vmatpush.bf16.msra.mxu0 0
    %1201 = vmatpush.bf16.msra.mxu0 0
    %1202 = vmatpush.bf16.msra.mxu0 0
    %1203 = vmatpush.bf16.msra.mxu0 0
    %1204 = vmatpush.bf16.msra.mxu0 0
    %1205 = vmatpush.bf16.msra.mxu0 %v780
    %1206 = vmatpush.bf16.msra.mxu0 %v779
    %1207 = vmatmul.bf16.gmra.mxu0 %v1197
    %v1208 = vpop.f32.mrf.mxu0
    %v1209 = vadd.f32 0.0, %v1208
    %v1210 = vpop.f32.mrf.mxu0
    %1211 = vdwg.mxu0
    %v1213 = vrot.slane %v1209, 4
    %v1215 = vadd.f32 %v764, %v1213
    %v1216 = vxor.u32 %v1215, 2147483648
    %v1217 = vmul.f32 %v1216, 1.442695
    %v1218 = vpow.pop %v1217
    %v1219 = vadd.f32 %v1218, 1.0
    %v1220 = vrcp.pop %v1219
    %v1221 = vmul.f32 %v1219, %v1220
    %v1222 = vsub.f32 1.0, %v1221
    %v1223 = vmul.f32 %v1220, %v1222
    %v1224 = vadd.f32 %v1220, %v1223
    %vm1225 = vweird.f32 %v1219
    %vm1226 = vweird.f32 %v1220
    %vm1227 = vmor %vm1225, %vm1226
    %v1228 = vsel %vm1227, %v1220, %v1224
    %v1229 = vand.u32 2147483647, %v1219
    %vm1230 = vcmp.eq.f32.partialorder %v1229, 8.507059e+37
    %v1231 = vand.u32 %v1219, 2147483648
    %v1232 = vor.u32 1.1754944e-38, %v1231
    %v1233 = vsel %vm1230, %v1232, %v1228
    %v1234 = vmul.f32 1.0, %v1233
    %v1235 = vtanh.pop %v1215
    %v1237 = vrot.slane %v1179, 6
    %v1239 = vmul.f32 %v1234, %v1237
    %1241 = vrot.lane.b32.xlu0 %v1235, 64
    %v1242 = vpop.permute.xlu0 %1241
    %v1244 = vmul.f32 %v1234, %v1242
    %1246 = vrot.lane.b32.xlu0 %v1244, 32
    %v1247 = vpop.permute.xlu0 %1246
    %v1249 = vadd.f32 %v1239, %v1247
    %v1250 = vtanh.pop %v1249
    %1252 = vrot.lane.b32.xlu0 %v1250, 64
    %v1253 = vpop.permute.xlu0 %1252
    %v1255 = vmul.f32 %v1234, %v1253
    %1257 = vrot.lane.b32.xlu0 %v1255, 32
    %v1258 = vpop.permute.xlu0 %1257
    %1260 = vst.msk [vmem:[#allocation2 + $0x8] sm:$0x30] %vm367, %v1258
    %v1261 = vpack.c.bf16 %v1255, %v1255
    %v1263 = vrot.slane %v1261, 2
    %1264 = vrot.lane.b32.xlu0 %v1263, 32
    %v1265 = vpop.permute.xlu0 %1264
    %v1267 = vsel %vm163, %v1265, 0
    %1269 = vmatpush.bf16.msra.mxu0 0
    %1270 = vmatpush.bf16.msra.mxu0 0
    %1271 = vmatpush.bf16.msra.mxu0 0
    %1272 = vmatpush.bf16.msra.mxu0 0
    %1273 = vmatpush.bf16.msra.mxu0 0
    %1274 = vmatpush.bf16.msra.mxu0 0
    %1275 = vmatpush.bf16.msra.mxu0 %v780
    %1276 = vmatpush.bf16.msra.mxu0 %v779
    %1277 = vmatmul.bf16.gmra.mxu0 %v1267
    %v1278 = vpop.f32.mrf.mxu0
    %v1279 = vadd.f32 0.0, %v1278
    %v1280 = vpop.f32.mrf.mxu0
    %1281 = vdwg.mxu0
    %v1283 = vrot.slane %v1279, 2
    %v1285 = vadd.f32 %v764, %v1283
    %v1286 = vxor.u32 %v1285, 2147483648
    %v1287 = vmul.f32 %v1286, 1.442695
    %v1288 = vpow.pop %v1287
    %v1289 = vadd.f32 %v1288, 1.0
    %v1290 = vrcp.pop %v1289
    %v1291 = vmul.f32 %v1289, %v1290
    %v1292 = vsub.f32 1.0, %v1291
    %v1293 = vmul.f32 %v1290, %v1292
    %v1294 = vadd.f32 %v1290, %v1293
    %vm1295 = vweird.f32 %v1289
    %vm1296 = vweird.f32 %v1290
    %vm1297 = vmor %vm1295, %vm1296
    %v1298 = vsel %vm1297, %v1290, %v1294
    %v1299 = vand.u32 2147483647, %v1289
    %vm1300 = vcmp.eq.f32.partialorder %v1299, 8.507059e+37
    %v1301 = vand.u32 %v1289, 2147483648
    %v1302 = vor.u32 1.1754944e-38, %v1301
    %v1303 = vsel %vm1300, %v1302, %v1298
    %v1304 = vmul.f32 1.0, %v1303
    %v1305 = vtanh.pop %v1285
    %v1307 = vrot.slane %v1249, 6
    %v1309 = vmul.f32 %v1304, %v1307
    %1311 = vrot.lane.b32.xlu0 %v1305, 64
    %v1312 = vpop.permute.xlu0 %1311
    %v1314 = vmul.f32 %v1304, %v1312
    %1316 = vrot.lane.b32.xlu0 %v1314, 32
    %v1317 = vpop.permute.xlu0 %1316
    %v1319 = vadd.f32 %v1309, %v1317
    %v1320 = vtanh.pop %v1319
    %1322 = vrot.lane.b32.xlu0 %v1320, 64
    %v1323 = vpop.permute.xlu0 %1322
    %v1325 = vmul.f32 %v1304, %v1323
    %1327 = vrot.lane.b32.xlu0 %v1325, 32
    %v1328 = vpop.permute.xlu0 %1327
    %1330 = vst.msk [vmem:[#allocation2 + $0x8] sm:$0xc0] %vm438, %v1328
    %s1331 = scalar_lea.vmem [#allocation11], 2
    %1332 = vst.msk [vmem:[%s1331 - $0x6] sm:$0xc0] %vm438, %v1328
    %1334 = vrot.lane.b32.xlu0 %v1319, 96
    %v1335 = vpop.permute.xlu0 %1334
    %s1337 = scalar_lea.vmem [#allocation12], 2
    %1338 = vst.msk [vmem:[%s1337 - $0x6] sm:$0xc0] %vm438, %v1335
    %v1339 = vld [vmem:[#allocation2] sm:$0xff]
    %v1340 = vld [vmem:[#allocation2 + $0x8] sm:$0xff]
    %v1341 = vpack.c.bf16 %v1340, %v1339
    %v1342 = vld [vmem:[#allocation9] sm:$0xf]
    %v1343 = vld [vmem:[#allocation9 + $0x4] sm:$0xf]
    %v1344 = vld [vmem:[#allocation9 + $0x8] sm:$0xf]
    %v1345 = vld [vmem:[#allocation9 + $0xc] sm:$0xf]
    %v1346 = vld [vmem:[%s10] sm:$0x1]
    %v1348 = vperm.slane %v1346, 0
    %v1354 = vunpack.c.l.b16 %v1342
    %v1355 = vunpack.c.l.b16 %v1343
    %v1356 = vunpack.c.l.b16 %v1344
    %v1357 = vunpack.c.l.b16 %v1345
    %v1358 = vpack.c.b16 %v1355, %v1354
    %v1359 = vpack.c.b16 %v1357, %v1356
    %v1363 = vsel %vm163, %v1341, 0
    %1365 = vmatpush.bf16.msra.mxu0 0
    %1366 = vmatpush.bf16.msra.mxu0 0
    %1367 = vmatpush.bf16.msra.mxu0 0
    %1368 = vmatpush.bf16.msra.mxu0 0
    %1369 = vmatpush.bf16.msra.mxu0 0
    %1370 = vmatpush.bf16.msra.mxu0 0
    %1371 = vmatpush.bf16.msra.mxu0 %v1359
    %1372 = vmatpush.bf16.msra.mxu0 %v1358
    %1373 = vmatmul.bf16.gmra.mxu0 %v1363
    %v1374 = vpop.f32.mrf.mxu0
    %v1375 = vadd.f32 %v1348, %v1374
    %v1376 = vpop.f32.mrf.mxu0
    %v1377 = vadd.f32 %v1348, %v1376
    %1378 = vdwg.mxu0
    %1379 = vst.msk [vmem:[%s11] sm:$0xff] %vm130, %v1375
    %1380 = vst.msk [vmem:[%s11 + $0x8] sm:$0xff] %vm130, %v1377
    // Predicated region
    $region62: #{rnn_forward.1} parent=1 // pred_check
      _
    $region63: #{rnn_forward.1} parent=1 // pred_check_branch
      %1382 = sbr.rel (0) target = $region65
    $region64: #{rnn_forward.1} parent=1 // pred_region
      _
    $region65: #{rnn_forward.1} parent=1 // pred_fallthru
      _
    // Predicated region
    $region66: #{rnn_forward.1} parent=1 // pred_check
      _
    $region67: #{rnn_forward.1} parent=1 // pred_check_branch
      %1384 = sbr.rel (0) target = $region69
    $region68: #{rnn_forward.1} parent=1 // pred_region
      %1386 = vsyncadd [#allocation5], 0
      %s1387 = sshll.u32 [#allocation11], 4
      %s1388 = int_to_ptr.vmem [resolvable:$true] %s1387
      %s1389 = sshll.u32 %s12, 4
      %s1390 = int_to_ptr.hbm [resolvable:$true] %s1389
      %1395 = dma.vmem_to_hbm [thread:$0]  %s1388, 64, %s1390, [#allocation5], 32, 32, 2
    $region69: #{rnn_forward.1} parent=1 // pred_fallthru
      _
    // Predicated region
    $region70: #{rnn_forward.1} parent=1 // pred_check
      _
    $region71: #{rnn_forward.1} parent=1 // pred_check_branch
      %1397 = sbr.rel (0) target = $region73
    $region72: #{rnn_forward.1} parent=1 // pred_region
      %1399 = vsyncadd [#allocation13], 0
      %s1400 = sshll.u32 [#allocation12], 4
      %s1401 = int_to_ptr.vmem [resolvable:$true] %s1400
      %s1402 = sshll.u32 %s13, 4
      %s1403 = int_to_ptr.hbm [resolvable:$true] %s1402
      %1408 = dma.vmem_to_hbm [thread:$0]  %s1401, 64, %s1403, [#allocation13], 32, 32, 2
    $region73: #{rnn_forward.1} parent=1 // pred_fallthru
      _
    // Predicated region
    $region74: #{rnn_forward.1} parent=1 // pred_check
      _
    $region75: #{rnn_forward.1} parent=1 // pred_check_branch
      %1410 = sbr.rel (0) target = $region77
    $region76: #{rnn_forward.1} parent=1 // pred_region
      _
    $region77: #{rnn_forward.1} parent=1 // pred_fallthru
      _
    // Predicated region
    $region78: #{rnn_forward.1} parent=1 // pred_check
      _
    $region79: #{rnn_forward.1} parent=1 // pred_check_branch
      %1412 = sbr.rel (0) target = $region81
    $region80: #{rnn_forward.1} parent=1 // pred_region
      %1414 = dma.done [#allocation5], 64
    $region81: #{rnn_forward.1} parent=1 // pred_fallthru
      _
    // Predicated region
    $region82: #{rnn_forward.1} parent=1 // pred_check
      _
    $region83: #{rnn_forward.1} parent=1 // pred_check_branch
      %1416 = sbr.rel (0) target = $region85
    $region84: #{rnn_forward.1} parent=1 // pred_region
      %1418 = dma.done [#allocation13], 64
    $region85: #{rnn_forward.1} parent=1 // pred_fallthru
      _
    %1419 = vsyncpa [#allocation4], 1
    %1420 = vsyncpa [#allocation7], 1
    %1421 = vsyncpa [#allocation10], 1
    %1422 = vsyncpa [#allocation5], 1
    %1423 = vsyncpa [#allocation13], 1

</llo_original>
